<compile_context>
chip_gen: v7x
topology: tpu7x:2x2x1
jax: 0.10.0
libtpu: 0.0.40
codegen_flags: <defaults>
</compile_context>

<pallas_src>
import functools

import jax
import jax.numpy as jnp
from jax.experimental import pallas as pl
from jax.experimental.pallas import tpu as pltpu


# ------------------------- configuration (mirrors model_config) -------------------------
MODEL_TYPE = "LSTM"      # one of "RNN", "LSTM", "GRU"
BIDIRECTIONAL = True     # num_direction = 2


def _num_gates(model_type: str) -> int:
    return {"RNN": 1, "LSTM": 4, "GRU": 3}[model_type]


# ------------------------------ Pallas recurrence kernel --------------------------------
def _recurrence_kernel(model_type, hidden_dim, seq_len, time_block, *refs):
    """grid = (num_dir, num_time_blocks); dimension_semantics = ("parallel", "arbitrary").

    refs (inputs..., output, scratch...):
      RNN : gi_ref, w_ref,           o_ref, h_sc
      LSTM: gi_ref, w_ref,           o_ref, h_sc, c_sc
      GRU : gi_ref, w_ref, bhh_ref,  o_ref, h_sc

      gi_ref : (1, TB, B, G*H)  precomputed x-side gate pre-activations, lane-dense gate
                                layout (biases folded in, except GRU's b_hh); backward
                                direction already time-reversed in the wrapper.
      w_ref  : (1, H, G*H)      fused hidden-side weights for this direction.
      bhh_ref: (1, 1, G*H)      hidden-side bias (GRU only: n-gate needs r * (Whh h + bhh)).
      o_ref  : (1, B, H)        hidden state this direction contributes to output[:, -1, :].
      h_sc   : (B, H)           hidden state, persists across time blocks.
      c_sc   : (B, H)           LSTM cell state.
    """
    H = hidden_dim
    if model_type == "GRU":
        gi_ref, w_ref, bhh_ref, o_ref, h_sc = refs
        c_sc = None
    elif model_type == "LSTM":
        gi_ref, w_ref, o_ref, h_sc, c_sc = refs
        bhh_ref = None
    else:  # RNN
        gi_ref, w_ref, o_ref, h_sc = refs
        bhh_ref = c_sc = None

    d = pl.program_id(0)     # direction: 0 = forward, 1 = backward
    tb = pl.program_id(1)    # time block

    # output[:, -1, :] uses the forward state after the LAST real step and the backward
    # state after its FIRST step (which processes original timestep S-1).
    save_step = jnp.where(d == 0, seq_len - 1, 0)

    @pl.when(tb == 0)
    def _init():
        h_sc[...] = jnp.zeros_like(h_sc)
        if c_sc is not None:
            c_sc[...] = jnp.zeros_like(c_sc)

    # Hoist weight/bias loads out of the (partially unrolled) time loop: one vld per
    # grid step instead of per unrolled iteration.
    w = w_ref[0]                                       # (H, G*H)
    b = bhh_ref[0] if bhh_ref is not None else None    # (1, G*H), GRU only

    def step_fn(t, carry):
        step = tb * time_block + t
        h = h_sc[...]
        # One fused MXU matmul for all gates: (B,H) x (H,G*H) -> (B,G*H).
        gh = jnp.dot(h, w, preferred_element_type=jnp.float32)
        gi = gi_ref[0, t]                              # (B, G*H), lane-dense

        if model_type == "RNN":
            h_new = jnp.tanh(gi + gh)
        elif model_type == "LSTM":                     # gate order (reordered): i, f, o, g
            z = gi + gh
            sig = jax.nn.sigmoid(z[:, : 3 * H])        # one EUP slab for i, f, o
            g_ = jnp.tanh(z[:, 3 * H:])
            i_g = sig[:, :H]
            f_g = sig[:, H:2 * H]
            o_g = sig[:, 2 * H:]
            c_new = f_g * c_sc[...] + i_g * g_
            c_sc[...] = c_new
            h_new = o_g * jnp.tanh(c_new)
        else:                                          # GRU, gate order: r, z, n
            ghb = gh + b
            rz = jax.nn.sigmoid(gi[:, : 2 * H] + ghb[:, : 2 * H])
            r = rz[:, :H]
            zg = rz[:, H:]
            n = jnp.tanh(gi[:, 2 * H:] + r * ghb[:, 2 * H:])
            h_new = (1.0 - zg) * n + zg * h

        h_sc[...] = h_new

        # Single guarded write of the one hidden state the module consumes; padded
        # steps (step >= seq_len) never match save_step.
        @pl.when(step == save_step)
        def _save():
            o_ref[0] = h_new

        return carry

    jax.lax.fori_loop(0, time_block, step_fn, 0, unroll=min(time_block, 8))


def _pick_time_block(seq_len, batch, gates, hidden, budget_bytes=16 << 20):
    """Size the per-grid-step time block from a VMEM budget for the double-buffered
    gi block (2 * TB * B * G*H * 4 bytes), clamped to the sequence length."""
    per_step = 2 * batch * gates * hidden * 4
    tb = max(1, budget_bytes // per_step)
    return int(min(tb, seq_len, 128))


def rnn_last_hidden(gi, whh_fused, bhh_fused, *, model_type, hidden_dim, seq_len,
                    time_block):
    """gi: (D, S_pad, B, G*H), whh_fused: (D, H, G*H), bhh_fused: (D, 1, G*H) or None.
    Returns (D, B, H): the per-direction hidden states that form output[:, -1, :]."""
    D, S_pad, B, GH = gi.shape
    assert S_pad % time_block == 0
    num_tb = S_pad // time_block

    in_specs = [
        pl.BlockSpec((1, time_block, B, GH), lambda dd, tt: (dd, tt, 0, 0)),
        # Weight block index is constant across tt; at production shapes add
        # pipeline_mode=pl.Buffered(1) to keep a single VMEM copy (v7x VMEM budget).
        pl.BlockSpec((1, hidden_dim, GH), lambda dd, tt: (dd, 0, 0)),
    ]
    inputs = [gi, whh_fused]
    if bhh_fused is not None:
        in_specs.append(pl.BlockSpec((1, 1, GH), lambda dd, tt: (dd, 0, 0)))
        inputs.append(bhh_fused)

    scratch_shapes = [pltpu.VMEM((B, hidden_dim), jnp.float32)]          # hidden state
    if model_type == "LSTM":
        scratch_shapes.append(pltpu.VMEM((B, hidden_dim), jnp.float32))  # cell state

    kernel = functools.partial(_recurrence_kernel, model_type, hidden_dim, seq_len,
                               time_block)
    return pl.pallas_call(
        kernel,
        grid=(D, num_tb),
        in_specs=in_specs,
        out_specs=pl.BlockSpec((1, B, hidden_dim), lambda dd, tt: (dd, 0, 0)),
        out_shape=jax.ShapeDtypeStruct((D, B, hidden_dim), jnp.float32),
        scratch_shapes=scratch_shapes,
        compiler_params=pltpu.CompilerParams(
            # Directions are independent, time axis is the serial recurrence.
            # TODO(synk): on v7x use pltpu.CORE_PARALLEL on the direction axis to shard
            # the two directions across the two TensorCores.
            dimension_semantics=("parallel", "arbitrary"),
            vmem_limit_bytes=64 * 1024 * 1024),
    )(*inputs)


# --------------------------------- full forward (module) --------------------------------
def sentence_classification_forward(x_ids, params, *, model_type, bidirectional):
    wih, whh = params["wih"], params["whh"]          # (D, G, E, H), (D, G, H, H)
    bih, bhh = params["bih"], params["bhh"]          # (D, G, H)
    D, G, E, H = wih.shape
    assert D == (2 if bidirectional else 1)
    B, S = x_ids.shape

    # ---- XLA glue: embedding gather (data-dependent gather has no clean Pallas win) ----
    emb = jnp.take(params["emb_weight"], x_ids, axis=0).astype(jnp.float32)   # (B, S, E)

    # Pad batch to a full sublane group so every vreg / MXU pass is dense.
    B_pad = -(-B // 8) * 8
    if B_pad != B:
        emb = jnp.pad(emb, ((0, B_pad - B), (0, 0), (0, 0)))

    emb_sbe = jnp.transpose(emb, (1, 0, 2))                                   # (S, Bp, E)
    # Backward direction: flip the SMALL emb tensor here so the kernel always walks time
    # forward — no gi-sized flip/concat HBM pass.
    if D == 2:
        emb_dir = jnp.stack([emb_sbe, emb_sbe[::-1]], axis=0)                 # (D,S,Bp,E)
    else:
        emb_dir = emb_sbe[None]

    # Reorder LSTM gates to (i, f, o, g) so the three sigmoid gates are one contiguous slab.
    if model_type == "LSTM":
        perm = [0, 1, 3, 2]
        wih, whh, bih, bhh = wih[:, perm], whh[:, perm], bih[:, perm], bhh[:, perm]

    # Fuse per-gate weights along the output (lane) axis: one MXU matmul per serial step.
    wih_fused = jnp.transpose(wih, (0, 2, 1, 3)).reshape(D, E, G * H)         # (D, E, GH)
    whh_fused = jnp.transpose(whh, (0, 2, 1, 3)).reshape(D, H, G * H)         # (D, H, GH)
    if model_type == "GRU":
        b_fold = bih.reshape(D, G * H)               # b_hh must stay under the r gate
        bhh_kernel = bhh.reshape(D, 1, G * H)
    else:
        b_fold = (bih + bhh).reshape(D, G * H)       # pre-summed biases, folded into gi
        bhh_kernel = None

    # Hoisted input-side projection: one batched, lane-dense matmul for ALL timesteps and
    # directions.  (bf16 storage with f32 accumulation is the production option here.)
    gi = jnp.einsum("dsbe,deh->dsbh", emb_dir, wih_fused) + b_fold[:, None, None, :]

    # Time-block the serial recurrence; pad time with zero gi (never consumed: padded
    # steps mutate h/c after save_step, and that state is discarded).
    time_block = _pick_time_block(S, B_pad, G, H)
    S_pad = -(-S // time_block) * time_block
    if S_pad != S:
        gi = jnp.pad(gi, ((0, 0), (0, S_pad - S), (0, 0), (0, 0)))

    h_last = rnn_last_hidden(gi, whh_fused, bhh_kernel, model_type=model_type,
                             hidden_dim=H, seq_len=S, time_block=time_block)  # (D, Bp, H)

    # output[:, -1, :] == concat over directions of the emitted hidden states.
    last_output = jnp.transpose(h_last[:, :B], (1, 0, 2)).reshape(B, D * H)
    # nn.Dropout is identity in eval mode; tiny (B, D*H) x (D*H, O) Linear stays in XLA.
    return last_output @ params["fc_w"] + params["fc_b"]


# ----------------------------- pure-JAX reference (for checking) ------------------------
def reference_forward(x_ids, params, *, model_type, bidirectional):
    emb = jnp.take(params["emb_weight"], x_ids, axis=0).astype(jnp.float32)
    xs = jnp.transpose(emb, (1, 0, 2))                # (S, B, E)
    G = _num_gates(model_type)
    H = params["whh"].shape[-1]
    B = x_ids.shape[0]

    def run(d, seq):
        wih, whh = params["wih"][d], params["whh"][d]
        bih, bhh = params["bih"][d], params["bhh"][d]

        def cell(carry, x):
            h, c = carry
            gi = [x @ wih[g] + bih[g] for g in range(G)]
            gh = [h @ whh[g] + bhh[g] for g in range(G)]
            if model_type == "RNN":
                h_new, c_new = jnp.tanh(gi[0] + gh[0]), c
            elif model_type == "LSTM":                # PyTorch gate order i, f, g, o
                i = jax.nn.sigmoid(gi[0] + gh[0]); f = jax.nn.sigmoid(gi[1] + gh[1])
                g_ = jnp.tanh(gi[2] + gh[2]);      o = jax.nn.sigmoid(gi[3] + gh[3])
                c_new = f * c + i * g_
                h_new = o * jnp.tanh(c_new)
            else:                                     # GRU gate order r, z, n
                r = jax.nn.sigmoid(gi[0] + gh[0]); z = jax.nn.sigmoid(gi[1] + gh[1])
                n = jnp.tanh(gi[2] + r * gh[2])
                h_new, c_new = (1.0 - z) * n + z * h, c
            return (h_new, c_new), h_new

        z0 = jnp.zeros((B, H), jnp.float32)
        _, hs = jax.lax.scan(cell, (z0, z0), seq)
        return hs

    last = run(0, xs)[-1]
    if bidirectional:
        last = jnp.concatenate([last, run(1, xs[::-1])[0]], axis=-1)
    return last @ params["fc_w"] + params["fc_b"]


# -------------------------------------- parameters --------------------------------------
def init_params(key, *, vocab_size, emb_dim, hidden_dim, output_dim,
                model_type, bidirectional):
    G = _num_gates(model_type)
    D = 2 if bidirectional else 1
    ks = jax.random.split(key, 7)
    s = 1.0 / float(hidden_dim) ** 0.5
    u = lambda k, shape: jax.random.uniform(k, shape, jnp.float32, -s, s)
    return {
        "emb_weight": jax.random.normal(ks[0], (vocab_size, emb_dim), jnp.float32),
        "wih": u(ks[1], (D, G, emb_dim, hidden_dim)),     # per-direction, per-gate
        "whh": u(ks[2], (D, G, hidden_dim, hidden_dim)),
        "bih": u(ks[3], (D, G, hidden_dim)),
        "bhh": u(ks[4], (D, G, hidden_dim)),
        "fc_w": u(ks[5], (hidden_dim * D, output_dim)),
        "fc_b": u(ks[6], (output_dim,)),
    }


# ------------------------------------------ main -----------------------------------------
if __name__ == "__main__":
    B, S = 2, 8
    VOCAB, EMB, HIDDEN, OUT = 100, 32, 32, 4

    key = jax.random.PRNGKey(0)
    k_param, k_ids = jax.random.split(key)
    params = init_params(k_param, vocab_size=VOCAB, emb_dim=EMB,
                         hidden_dim=HIDDEN, output_dim=OUT,
                         model_type=MODEL_TYPE, bidirectional=BIDIRECTIONAL)
    x_ids = jax.random.randint(k_ids, (B, S), 0, VOCAB, dtype=jnp.int32)

    fwd = jax.jit(functools.partial(sentence_classification_forward,
                                    model_type=MODEL_TYPE, bidirectional=BIDIRECTIONAL))
    logits = fwd(x_ids, params)
    jax.block_until_ready(logits)
    assert logits.shape == (B, OUT)

    logits_ref = reference_forward(x_ids, params, model_type=MODEL_TYPE,
                                   bidirectional=BIDIRECTIONAL)
    assert jnp.allclose(logits, logits_ref, atol=1e-4, rtol=1e-4), \
        "Pallas forward disagrees with pure-JAX reference"

    print("KERNEL_OK")
</pallas_src>

<mosaic_0001>
module attributes {stable_mosaic.version = 11 : i64} {
  func.func @_recurrence_kernel(%arg0: i32, %arg1: i32, %arg2: memref<1x8x8x128xf32, #tpu.memory_space<vmem>>, %arg3: memref<1x32x128xf32, #tpu.memory_space<vmem>>, %arg4: memref<1x8x32xf32, #tpu.memory_space<vmem>>, %arg5: memref<8x32xf32, #tpu.memory_space<vmem>>, %arg6: memref<8x32xf32, #tpu.memory_space<vmem>>) attributes {dimension_semantics = [#tpu.dimension_semantics<parallel>, #tpu.dimension_semantics<arbitrary>], iteration_bounds = array<i64: 2, 1>, scalar_prefetch = 0 : i64, scratch_operands = 2 : i64, tpu.core_type = #tpu.core_type<tc>, window_params = [{transform_indices = @transform_0, window_bounds = array<i64: 1, 8, 8, 128>}, {transform_indices = @transform_1, window_bounds = array<i64: 1, 32, 128>}, {transform_indices = @transform_2, window_bounds = array<i64: 1, 8, 32>}]} {
    %c0_i32 = arith.constant 0 : i32
    %0 = arith.cmpi eq, %arg0, %c0_i32 : i32
    %c7_i32 = arith.constant 7 : i32
    %c0_i32_0 = arith.constant 0 : i32
    %1 = arith.select %0, %c7_i32, %c0_i32_0 : i32
    %c0_i32_1 = arith.constant 0 : i32
    %2 = arith.cmpi eq, %arg1, %c0_i32_1 : i32
    %3 = arith.extui %2 : i1 to i32
    %c0_i32_2 = arith.constant 0 : i32
    %4 = arith.cmpi ne, %3, %c0_i32_2 : i32
    scf.if %4 {
      %cst_126 = arith.constant 0.000000e+00 : f32
      %247 = vector.broadcast %cst_126 : f32 to vector<8x32xf32>
      %c0_127 = arith.constant 0 : index
      %c0_128 = arith.constant 0 : index
      %248 = vector.load %arg5[%c0_127, %c0_128] : memref<8x32xf32, #tpu.memory_space<vmem>>, vector<8x32xf32>
      tpu.vector_store %arg5[%c0_127, %c0_128], %247 {strides = array<i32>} : memref<8x32xf32, #tpu.memory_space<vmem>>, vector<8x32xf32>,
      %cst_129 = arith.constant 0.000000e+00 : f32
      %249 = vector.broadcast %cst_129 : f32 to vector<8x32xf32>
      %c0_130 = arith.constant 0 : index
      %c0_131 = arith.constant 0 : index
      %250 = vector.load %arg6[%c0_130, %c0_131] : memref<8x32xf32, #tpu.memory_space<vmem>>, vector<8x32xf32>
      tpu.vector_store %arg6[%c0_130, %c0_131], %249 {strides = array<i32>} : memref<8x32xf32, #tpu.memory_space<vmem>>, vector<8x32xf32>,
    } else {
    }
    %c0 = arith.constant 0 : index
    %c0_3 = arith.constant 0 : index
    %c0_4 = arith.constant 0 : index
    %5 = vector.load %arg3[%c0, %c0_3, %c0_4] : memref<1x32x128xf32, #tpu.memory_space<vmem>>, vector<1x32x128xf32>
    %6 = vector.shape_cast %5 : vector<1x32x128xf32> to vector<32x128xf32>
    %c0_i32_5 = arith.constant 0 : i32
    %c8_i32 = arith.constant 8 : i32
    %7 = arith.muli %arg1, %c8_i32 : i32
    %8 = arith.addi %7, %c0_i32_5 : i32
    %c0_6 = arith.constant 0 : index
    %c0_7 = arith.constant 0 : index
    %9 = vector.load %arg5[%c0_6, %c0_7] : memref<8x32xf32, #tpu.memory_space<vmem>>, vector<8x32xf32>
    %cst = arith.constant dense<0.000000e+00> : vector<8x128xf32>
    %10 = tpu.matmul %9, %6, %cst {dimension_numbers = #tpu.dot_dimension_numbers<[1], [0], [0], [1], [0, 0, 1, 1], [], []>} : vector<8x32xf32>, vector<32x128xf32>, vector<8x128xf32> -> vector<8x128xf32>
    %c0_8 = arith.constant 0 : index
    %11 = arith.index_cast %c0_i32_5 : i32 to index
    %c0_9 = arith.constant 0 : index
    %c0_10 = arith.constant 0 : index
    %12 = vector.load %arg2[%c0_8, %11, %c0_9, %c0_10] : memref<1x8x8x128xf32, #tpu.memory_space<vmem>>, vector<1x1x8x128xf32>
    %13 = vector.shape_cast %12 : vector<1x1x8x128xf32> to vector<8x128xf32>
    %14 = arith.addf %13, %10 : vector<8x128xf32>
    %15 = vector.extract_strided_slice %14 {offsets = [0, 0], sizes = [8, 96], strides = [1, 1]} : vector<8x128xf32> to vector<8x96xf32>
    %16 = arith.negf %15 : vector<8x96xf32>
    %17 = math.exp %16 : vector<8x96xf32>
    %cst_11 = arith.constant 1.000000e+00 : f32
    %18 = vector.broadcast %cst_11 : f32 to vector<8x96xf32>
    %19 = arith.addf %18, %17 : vector<8x96xf32>
    %20 = arith.divf %18, %19 : vector<8x96xf32>
    %21 = vector.extract_strided_slice %14 {offsets = [0, 96], sizes = [8, 32], strides = [1, 1]} : vector<8x128xf32> to vector<8x32xf32>
    %22 = math.tanh %21 : vector<8x32xf32>
    %23 = vector.extract_strided_slice %20 {offsets = [0, 0], sizes = [8, 32], strides = [1, 1]} : vector<8x96xf32> to vector<8x32xf32>
    %24 = vector.extract_strided_slice %20 {offsets = [0, 32], sizes = [8, 32], strides = [1, 1]} : vector<8x96xf32> to vector<8x32xf32>
    %25 = vector.extract_strided_slice %20 {offsets = [0, 64], sizes = [8, 32], strides = [1, 1]} : vector<8x96xf32> to vector<8x32xf32>
    %c0_12 = arith.constant 0 : index
    %c0_13 = arith.constant 0 : index
    %26 = vector.load %arg6[%c0_12, %c0_13] : memref<8x32xf32, #tpu.memory_space<vmem>>, vector<8x32xf32>
    %27 = arith.mulf %24, %26 : vector<8x32xf32>
    %28 = arith.mulf %23, %22 : vector<8x32xf32>
    %29 = arith.addf %27, %28 : vector<8x32xf32>
    %c0_14 = arith.constant 0 : index
    %c0_15 = arith.constant 0 : index
    %30 = vector.load %arg6[%c0_14, %c0_15] : memref<8x32xf32, #tpu.memory_space<vmem>>, vector<8x32xf32>
    tpu.vector_store %arg6[%c0_14, %c0_15], %29 {strides = array<i32>} : memref<8x32xf32, #tpu.memory_space<vmem>>, vector<8x32xf32>,
    %31 = math.tanh %29 : vector<8x32xf32>
    %32 = arith.mulf %25, %31 : vector<8x32xf32>
    %c0_16 = arith.constant 0 : index
    %c0_17 = arith.constant 0 : index
    %33 = vector.load %arg5[%c0_16, %c0_17] : memref<8x32xf32, #tpu.memory_space<vmem>>, vector<8x32xf32>
    tpu.vector_store %arg5[%c0_16, %c0_17], %32 {strides = array<i32>} : memref<8x32xf32, #tpu.memory_space<vmem>>, vector<8x32xf32>,
    %34 = arith.cmpi eq, %8, %1 : i32
    %35 = arith.extui %34 : i1 to i32
    %c0_i32_18 = arith.constant 0 : i32
    %36 = arith.cmpi ne, %35, %c0_i32_18 : i32
    scf.if %36 {
      %c0_126 = arith.constant 0 : index
      %c0_127 = arith.constant 0 : index
      %c0_128 = arith.constant 0 : index
      %247 = vector.load %arg4[%c0_126, %c0_127, %c0_128] : memref<1x8x32xf32, #tpu.memory_space<vmem>>, vector<1x8x32xf32>
      %248 = vector.shape_cast %247 : vector<1x8x32xf32> to vector<8x32xf32>
      %249 = vector.shape_cast %32 : vector<8x32xf32> to vector<1x8x32xf32>
      tpu.vector_store %arg4[%c0_126, %c0_127, %c0_128], %249 {strides = array<i32>} : memref<1x8x32xf32, #tpu.memory_space<vmem>>, vector<1x8x32xf32>,
    } else {
    }
    %c1_i32 = arith.constant 1 : i32
    %c8_i32_19 = arith.constant 8 : i32
    %37 = arith.muli %arg1, %c8_i32_19 : i32
    %38 = arith.addi %37, %c1_i32 : i32
    %c0_20 = arith.constant 0 : index
    %c0_21 = arith.constant 0 : index
    %39 = vector.load %arg5[%c0_20, %c0_21] : memref<8x32xf32, #tpu.memory_space<vmem>>, vector<8x32xf32>
    %cst_22 = arith.constant dense<0.000000e+00> : vector<8x128xf32>
    %40 = tpu.matmul %39, %6, %cst_22 {dimension_numbers = #tpu.dot_dimension_numbers<[1], [0], [0], [1], [0, 0, 1, 1], [], []>} : vector<8x32xf32>, vector<32x128xf32>, vector<8x128xf32> -> vector<8x128xf32>
    %c0_23 = arith.constant 0 : index
    %41 = arith.index_cast %c1_i32 : i32 to index
    %c0_24 = arith.constant 0 : index
    %c0_25 = arith.constant 0 : index
    %42 = vector.load %arg2[%c0_23, %41, %c0_24, %c0_25] : memref<1x8x8x128xf32, #tpu.memory_space<vmem>>, vector<1x1x8x128xf32>
    %43 = vector.shape_cast %42 : vector<1x1x8x128xf32> to vector<8x128xf32>
    %44 = arith.addf %43, %40 : vector<8x128xf32>
    %45 = vector.extract_strided_slice %44 {offsets = [0, 0], sizes = [8, 96], strides = [1, 1]} : vector<8x128xf32> to vector<8x96xf32>
    %46 = arith.negf %45 : vector<8x96xf32>
    %47 = math.exp %46 : vector<8x96xf32>
    %cst_26 = arith.constant 1.000000e+00 : f32
    %48 = vector.broadcast %cst_26 : f32 to vector<8x96xf32>
    %49 = arith.addf %48, %47 : vector<8x96xf32>
    %50 = arith.divf %48, %49 : vector<8x96xf32>
    %51 = vector.extract_strided_slice %44 {offsets = [0, 96], sizes = [8, 32], strides = [1, 1]} : vector<8x128xf32> to vector<8x32xf32>
    %52 = math.tanh %51 : vector<8x32xf32>
    %53 = vector.extract_strided_slice %50 {offsets = [0, 0], sizes = [8, 32], strides = [1, 1]} : vector<8x96xf32> to vector<8x32xf32>
    %54 = vector.extract_strided_slice %50 {offsets = [0, 32], sizes = [8, 32], strides = [1, 1]} : vector<8x96xf32> to vector<8x32xf32>
    %55 = vector.extract_strided_slice %50 {offsets = [0, 64], sizes = [8, 32], strides = [1, 1]} : vector<8x96xf32> to vector<8x32xf32>
    %c0_27 = arith.constant 0 : index
    %c0_28 = arith.constant 0 : index
    %56 = vector.load %arg6[%c0_27, %c0_28] : memref<8x32xf32, #tpu.memory_space<vmem>>, vector<8x32xf32>
    %57 = arith.mulf %54, %56 : vector<8x32xf32>
    %58 = arith.mulf %53, %52 : vector<8x32xf32>
    %59 = arith.addf %57, %58 : vector<8x32xf32>
    %c0_29 = arith.constant 0 : index
    %c0_30 = arith.constant 0 : index
    %60 = vector.load %arg6[%c0_29, %c0_30] : memref<8x32xf32, #tpu.memory_space<vmem>>, vector<8x32xf32>
    tpu.vector_store %arg6[%c0_29, %c0_30], %59 {strides = array<i32>} : memref<8x32xf32, #tpu.memory_space<vmem>>, vector<8x32xf32>,
    %61 = math.tanh %59 : vector<8x32xf32>
    %62 = arith.mulf %55, %61 : vector<8x32xf32>
    %c0_31 = arith.constant 0 : index
    %c0_32 = arith.constant 0 : index
    %63 = vector.load %arg5[%c0_31, %c0_32] : memref<8x32xf32, #tpu.memory_space<vmem>>, vector<8x32xf32>
    tpu.vector_store %arg5[%c0_31, %c0_32], %62 {strides = array<i32>} : memref<8x32xf32, #tpu.memory_space<vmem>>, vector<8x32xf32>,
    %64 = arith.cmpi eq, %38, %1 : i32
    %65 = arith.extui %64 : i1 to i32
    %c0_i32_33 = arith.constant 0 : i32
    %66 = arith.cmpi ne, %65, %c0_i32_33 : i32
    scf.if %66 {
      %c0_126 = arith.constant 0 : index
      %c0_127 = arith.constant 0 : index
      %c0_128 = arith.constant 0 : index
      %247 = vector.load %arg4[%c0_126, %c0_127, %c0_128] : memref<1x8x32xf32, #tpu.memory_space<vmem>>, vector<1x8x32xf32>
      %248 = vector.shape_cast %247 : vector<1x8x32xf32> to vector<8x32xf32>
      %249 = vector.shape_cast %62 : vector<8x32xf32> to vector<1x8x32xf32>
      tpu.vector_store %arg4[%c0_126, %c0_127, %c0_128], %249 {strides = array<i32>} : memref<1x8x32xf32, #tpu.memory_space<vmem>>, vector<1x8x32xf32>,
    } else {
    }
    %c2_i32 = arith.constant 2 : i32
    %c8_i32_34 = arith.constant 8 : i32
    %67 = arith.muli %arg1, %c8_i32_34 : i32
    %68 = arith.addi %67, %c2_i32 : i32
    %c0_35 = arith.constant 0 : index
    %c0_36 = arith.constant 0 : index
    %69 = vector.load %arg5[%c0_35, %c0_36] : memref<8x32xf32, #tpu.memory_space<vmem>>, vector<8x32xf32>
    %cst_37 = arith.constant dense<0.000000e+00> : vector<8x128xf32>
    %70 = tpu.matmul %69, %6, %cst_37 {dimension_numbers = #tpu.dot_dimension_numbers<[1], [0], [0], [1], [0, 0, 1, 1], [], []>} : vector<8x32xf32>, vector<32x128xf32>, vector<8x128xf32> -> vector<8x128xf32>
    %c0_38 = arith.constant 0 : index
    %71 = arith.index_cast %c2_i32 : i32 to index
    %c0_39 = arith.constant 0 : index
    %c0_40 = arith.constant 0 : index
    %72 = vector.load %arg2[%c0_38, %71, %c0_39, %c0_40] : memref<1x8x8x128xf32, #tpu.memory_space<vmem>>, vector<1x1x8x128xf32>
    %73 = vector.shape_cast %72 : vector<1x1x8x128xf32> to vector<8x128xf32>
    %74 = arith.addf %73, %70 : vector<8x128xf32>
    %75 = vector.extract_strided_slice %74 {offsets = [0, 0], sizes = [8, 96], strides = [1, 1]} : vector<8x128xf32> to vector<8x96xf32>
    %76 = arith.negf %75 : vector<8x96xf32>
    %77 = math.exp %76 : vector<8x96xf32>
    %cst_41 = arith.constant 1.000000e+00 : f32
    %78 = vector.broadcast %cst_41 : f32 to vector<8x96xf32>
    %79 = arith.addf %78, %77 : vector<8x96xf32>
    %80 = arith.divf %78, %79 : vector<8x96xf32>
    %81 = vector.extract_strided_slice %74 {offsets = [0, 96], sizes = [8, 32], strides = [1, 1]} : vector<8x128xf32> to vector<8x32xf32>
    %82 = math.tanh %81 : vector<8x32xf32>
    %83 = vector.extract_strided_slice %80 {offsets = [0, 0], sizes = [8, 32], strides = [1, 1]} : vector<8x96xf32> to vector<8x32xf32>
    %84 = vector.extract_strided_slice %80 {offsets = [0, 32], sizes = [8, 32], strides = [1, 1]} : vector<8x96xf32> to vector<8x32xf32>
    %85 = vector.extract_strided_slice %80 {offsets = [0, 64], sizes = [8, 32], strides = [1, 1]} : vector<8x96xf32> to vector<8x32xf32>
    %c0_42 = arith.constant 0 : index
    %c0_43 = arith.constant 0 : index
    %86 = vector.load %arg6[%c0_42, %c0_43] : memref<8x32xf32, #tpu.memory_space<vmem>>, vector<8x32xf32>
    %87 = arith.mulf %84, %86 : vector<8x32xf32>
    %88 = arith.mulf %83, %82 : vector<8x32xf32>
    %89 = arith.addf %87, %88 : vector<8x32xf32>
    %c0_44 = arith.constant 0 : index
    %c0_45 = arith.constant 0 : index
    %90 = vector.load %arg6[%c0_44, %c0_45] : memref<8x32xf32, #tpu.memory_space<vmem>>, vector<8x32xf32>
    tpu.vector_store %arg6[%c0_44, %c0_45], %89 {strides = array<i32>} : memref<8x32xf32, #tpu.memory_space<vmem>>, vector<8x32xf32>,
    %91 = math.tanh %89 : vector<8x32xf32>
    %92 = arith.mulf %85, %91 : vector<8x32xf32>
    %c0_46 = arith.constant 0 : index
    %c0_47 = arith.constant 0 : index
    %93 = vector.load %arg5[%c0_46, %c0_47] : memref<8x32xf32, #tpu.memory_space<vmem>>, vector<8x32xf32>
    tpu.vector_store %arg5[%c0_46, %c0_47], %92 {strides = array<i32>} : memref<8x32xf32, #tpu.memory_space<vmem>>, vector<8x32xf32>,
    %94 = arith.cmpi eq, %68, %1 : i32
    %95 = arith.extui %94 : i1 to i32
    %c0_i32_48 = arith.constant 0 : i32
    %96 = arith.cmpi ne, %95, %c0_i32_48 : i32
    scf.if %96 {
      %c0_126 = arith.constant 0 : index
      %c0_127 = arith.constant 0 : index
      %c0_128 = arith.constant 0 : index
      %247 = vector.load %arg4[%c0_126, %c0_127, %c0_128] : memref<1x8x32xf32, #tpu.memory_space<vmem>>, vector<1x8x32xf32>
      %248 = vector.shape_cast %247 : vector<1x8x32xf32> to vector<8x32xf32>
      %249 = vector.shape_cast %92 : vector<8x32xf32> to vector<1x8x32xf32>
      tpu.vector_store %arg4[%c0_126, %c0_127, %c0_128], %249 {strides = array<i32>} : memref<1x8x32xf32, #tpu.memory_space<vmem>>, vector<1x8x32xf32>,
    } else {
    }
    %c3_i32 = arith.constant 3 : i32
    %c8_i32_49 = arith.constant 8 : i32
    %97 = arith.muli %arg1, %c8_i32_49 : i32
    %98 = arith.addi %97, %c3_i32 : i32
    %c0_50 = arith.constant 0 : index
    %c0_51 = arith.constant 0 : index
    %99 = vector.load %arg5[%c0_50, %c0_51] : memref<8x32xf32, #tpu.memory_space<vmem>>, vector<8x32xf32>
    %cst_52 = arith.constant dense<0.000000e+00> : vector<8x128xf32>
    %100 = tpu.matmul %99, %6, %cst_52 {dimension_numbers = #tpu.dot_dimension_numbers<[1], [0], [0], [1], [0, 0, 1, 1], [], []>} : vector<8x32xf32>, vector<32x128xf32>, vector<8x128xf32> -> vector<8x128xf32>
    %c0_53 = arith.constant 0 : index
    %101 = arith.index_cast %c3_i32 : i32 to index
    %c0_54 = arith.constant 0 : index
    %c0_55 = arith.constant 0 : index
    %102 = vector.load %arg2[%c0_53, %101, %c0_54, %c0_55] : memref<1x8x8x128xf32, #tpu.memory_space<vmem>>, vector<1x1x8x128xf32>
    %103 = vector.shape_cast %102 : vector<1x1x8x128xf32> to vector<8x128xf32>
    %104 = arith.addf %103, %100 : vector<8x128xf32>
    %105 = vector.extract_strided_slice %104 {offsets = [0, 0], sizes = [8, 96], strides = [1, 1]} : vector<8x128xf32> to vector<8x96xf32>
    %106 = arith.negf %105 : vector<8x96xf32>
    %107 = math.exp %106 : vector<8x96xf32>
    %cst_56 = arith.constant 1.000000e+00 : f32
    %108 = vector.broadcast %cst_56 : f32 to vector<8x96xf32>
    %109 = arith.addf %108, %107 : vector<8x96xf32>
    %110 = arith.divf %108, %109 : vector<8x96xf32>
    %111 = vector.extract_strided_slice %104 {offsets = [0, 96], sizes = [8, 32], strides = [1, 1]} : vector<8x128xf32> to vector<8x32xf32>
    %112 = math.tanh %111 : vector<8x32xf32>
    %113 = vector.extract_strided_slice %110 {offsets = [0, 0], sizes = [8, 32], strides = [1, 1]} : vector<8x96xf32> to vector<8x32xf32>
    %114 = vector.extract_strided_slice %110 {offsets = [0, 32], sizes = [8, 32], strides = [1, 1]} : vector<8x96xf32> to vector<8x32xf32>
    %115 = vector.extract_strided_slice %110 {offsets = [0, 64], sizes = [8, 32], strides = [1, 1]} : vector<8x96xf32> to vector<8x32xf32>
    %c0_57 = arith.constant 0 : index
    %c0_58 = arith.constant 0 : index
    %116 = vector.load %arg6[%c0_57, %c0_58] : memref<8x32xf32, #tpu.memory_space<vmem>>, vector<8x32xf32>
    %117 = arith.mulf %114, %116 : vector<8x32xf32>
    %118 = arith.mulf %113, %112 : vector<8x32xf32>
    %119 = arith.addf %117, %118 : vector<8x32xf32>
    %c0_59 = arith.constant 0 : index
    %c0_60 = arith.constant 0 : index
    %120 = vector.load %arg6[%c0_59, %c0_60] : memref<8x32xf32, #tpu.memory_space<vmem>>, vector<8x32xf32>
    tpu.vector_store %arg6[%c0_59, %c0_60], %119 {strides = array<i32>} : memref<8x32xf32, #tpu.memory_space<vmem>>, vector<8x32xf32>,
    %121 = math.tanh %119 : vector<8x32xf32>
    %122 = arith.mulf %115, %121 : vector<8x32xf32>
    %c0_61 = arith.constant 0 : index
    %c0_62 = arith.constant 0 : index
    %123 = vector.load %arg5[%c0_61, %c0_62] : memref<8x32xf32, #tpu.memory_space<vmem>>, vector<8x32xf32>
    tpu.vector_store %arg5[%c0_61, %c0_62], %122 {strides = array<i32>} : memref<8x32xf32, #tpu.memory_space<vmem>>, vector<8x32xf32>,
    %124 = arith.cmpi eq, %98, %1 : i32
    %125 = arith.extui %124 : i1 to i32
    %c0_i32_63 = arith.constant 0 : i32
    %126 = arith.cmpi ne, %125, %c0_i32_63 : i32
    scf.if %126 {
      %c0_126 = arith.constant 0 : index
      %c0_127 = arith.constant 0 : index
      %c0_128 = arith.constant 0 : index
      %247 = vector.load %arg4[%c0_126, %c0_127, %c0_128] : memref<1x8x32xf32, #tpu.memory_space<vmem>>, vector<1x8x32xf32>
      %248 = vector.shape_cast %247 : vector<1x8x32xf32> to vector<8x32xf32>
      %249 = vector.shape_cast %122 : vector<8x32xf32> to vector<1x8x32xf32>
      tpu.vector_store %arg4[%c0_126, %c0_127, %c0_128], %249 {strides = array<i32>} : memref<1x8x32xf32, #tpu.memory_space<vmem>>, vector<1x8x32xf32>,
    } else {
    }
    %c4_i32 = arith.constant 4 : i32
    %c8_i32_64 = arith.constant 8 : i32
    %127 = arith.muli %arg1, %c8_i32_64 : i32
    %128 = arith.addi %127, %c4_i32 : i32
    %c0_65 = arith.constant 0 : index
    %c0_66 = arith.constant 0 : index
    %129 = vector.load %arg5[%c0_65, %c0_66] : memref<8x32xf32, #tpu.memory_space<vmem>>, vector<8x32xf32>
    %cst_67 = arith.constant dense<0.000000e+00> : vector<8x128xf32>
    %130 = tpu.matmul %129, %6, %cst_67 {dimension_numbers = #tpu.dot_dimension_numbers<[1], [0], [0], [1], [0, 0, 1, 1], [], []>} : vector<8x32xf32>, vector<32x128xf32>, vector<8x128xf32> -> vector<8x128xf32>
    %c0_68 = arith.constant 0 : index
    %131 = arith.index_cast %c4_i32 : i32 to index
    %c0_69 = arith.constant 0 : index
    %c0_70 = arith.constant 0 : index
    %132 = vector.load %arg2[%c0_68, %131, %c0_69, %c0_70] : memref<1x8x8x128xf32, #tpu.memory_space<vmem>>, vector<1x1x8x128xf32>
    %133 = vector.shape_cast %132 : vector<1x1x8x128xf32> to vector<8x128xf32>
    %134 = arith.addf %133, %130 : vector<8x128xf32>
    %135 = vector.extract_strided_slice %134 {offsets = [0, 0], sizes = [8, 96], strides = [1, 1]} : vector<8x128xf32> to vector<8x96xf32>
    %136 = arith.negf %135 : vector<8x96xf32>
    %137 = math.exp %136 : vector<8x96xf32>
    %cst_71 = arith.constant 1.000000e+00 : f32
    %138 = vector.broadcast %cst_71 : f32 to vector<8x96xf32>
    %139 = arith.addf %138, %137 : vector<8x96xf32>
    %140 = arith.divf %138, %139 : vector<8x96xf32>
    %141 = vector.extract_strided_slice %134 {offsets = [0, 96], sizes = [8, 32], strides = [1, 1]} : vector<8x128xf32> to vector<8x32xf32>
    %142 = math.tanh %141 : vector<8x32xf32>
    %143 = vector.extract_strided_slice %140 {offsets = [0, 0], sizes = [8, 32], strides = [1, 1]} : vector<8x96xf32> to vector<8x32xf32>
    %144 = vector.extract_strided_slice %140 {offsets = [0, 32], sizes = [8, 32], strides = [1, 1]} : vector<8x96xf32> to vector<8x32xf32>
    %145 = vector.extract_strided_slice %140 {offsets = [0, 64], sizes = [8, 32], strides = [1, 1]} : vector<8x96xf32> to vector<8x32xf32>
    %c0_72 = arith.constant 0 : index
    %c0_73 = arith.constant 0 : index
    %146 = vector.load %arg6[%c0_72, %c0_73] : memref<8x32xf32, #tpu.memory_space<vmem>>, vector<8x32xf32>
    %147 = arith.mulf %144, %146 : vector<8x32xf32>
    %148 = arith.mulf %143, %142 : vector<8x32xf32>
    %149 = arith.addf %147, %148 : vector<8x32xf32>
    %c0_74 = arith.constant 0 : index
    %c0_75 = arith.constant 0 : index
    %150 = vector.load %arg6[%c0_74, %c0_75] : memref<8x32xf32, #tpu.memory_space<vmem>>, vector<8x32xf32>
    tpu.vector_store %arg6[%c0_74, %c0_75], %149 {strides = array<i32>} : memref<8x32xf32, #tpu.memory_space<vmem>>, vector<8x32xf32>,
    %151 = math.tanh %149 : vector<8x32xf32>
    %152 = arith.mulf %145, %151 : vector<8x32xf32>
    %c0_76 = arith.constant 0 : index
    %c0_77 = arith.constant 0 : index
    %153 = vector.load %arg5[%c0_76, %c0_77] : memref<8x32xf32, #tpu.memory_space<vmem>>, vector<8x32xf32>
    tpu.vector_store %arg5[%c0_76, %c0_77], %152 {strides = array<i32>} : memref<8x32xf32, #tpu.memory_space<vmem>>, vector<8x32xf32>,
    %154 = arith.cmpi eq, %128, %1 : i32
    %155 = arith.extui %154 : i1 to i32
    %c0_i32_78 = arith.constant 0 : i32
    %156 = arith.cmpi ne, %155, %c0_i32_78 : i32
    scf.if %156 {
      %c0_126 = arith.constant 0 : index
      %c0_127 = arith.constant 0 : index
      %c0_128 = arith.constant 0 : index
      %247 = vector.load %arg4[%c0_126, %c0_127, %c0_128] : memref<1x8x32xf32, #tpu.memory_space<vmem>>, vector<1x8x32xf32>
      %248 = vector.shape_cast %247 : vector<1x8x32xf32> to vector<8x32xf32>
      %249 = vector.shape_cast %152 : vector<8x32xf32> to vector<1x8x32xf32>
      tpu.vector_store %arg4[%c0_126, %c0_127, %c0_128], %249 {strides = array<i32>} : memref<1x8x32xf32, #tpu.memory_space<vmem>>, vector<1x8x32xf32>,
    } else {
    }
    %c5_i32 = arith.constant 5 : i32
    %c8_i32_79 = arith.constant 8 : i32
    %157 = arith.muli %arg1, %c8_i32_79 : i32
    %158 = arith.addi %157, %c5_i32 : i32
    %c0_80 = arith.constant 0 : index
    %c0_81 = arith.constant 0 : index
    %159 = vector.load %arg5[%c0_80, %c0_81] : memref<8x32xf32, #tpu.memory_space<vmem>>, vector<8x32xf32>
    %cst_82 = arith.constant dense<0.000000e+00> : vector<8x128xf32>
    %160 = tpu.matmul %159, %6, %cst_82 {dimension_numbers = #tpu.dot_dimension_numbers<[1], [0], [0], [1], [0, 0, 1, 1], [], []>} : vector<8x32xf32>, vector<32x128xf32>, vector<8x128xf32> -> vector<8x128xf32>
    %c0_83 = arith.constant 0 : index
    %161 = arith.index_cast %c5_i32 : i32 to index
    %c0_84 = arith.constant 0 : index
    %c0_85 = arith.constant 0 : index
    %162 = vector.load %arg2[%c0_83, %161, %c0_84, %c0_85] : memref<1x8x8x128xf32, #tpu.memory_space<vmem>>, vector<1x1x8x128xf32>
    %163 = vector.shape_cast %162 : vector<1x1x8x128xf32> to vector<8x128xf32>
    %164 = arith.addf %163, %160 : vector<8x128xf32>
    %165 = vector.extract_strided_slice %164 {offsets = [0, 0], sizes = [8, 96], strides = [1, 1]} : vector<8x128xf32> to vector<8x96xf32>
    %166 = arith.negf %165 : vector<8x96xf32>
    %167 = math.exp %166 : vector<8x96xf32>
    %cst_86 = arith.constant 1.000000e+00 : f32
    %168 = vector.broadcast %cst_86 : f32 to vector<8x96xf32>
    %169 = arith.addf %168, %167 : vector<8x96xf32>
    %170 = arith.divf %168, %169 : vector<8x96xf32>
    %171 = vector.extract_strided_slice %164 {offsets = [0, 96], sizes = [8, 32], strides = [1, 1]} : vector<8x128xf32> to vector<8x32xf32>
    %172 = math.tanh %171 : vector<8x32xf32>
    %173 = vector.extract_strided_slice %170 {offsets = [0, 0], sizes = [8, 32], strides = [1, 1]} : vector<8x96xf32> to vector<8x32xf32>
    %174 = vector.extract_strided_slice %170 {offsets = [0, 32], sizes = [8, 32], strides = [1, 1]} : vector<8x96xf32> to vector<8x32xf32>
    %175 = vector.extract_strided_slice %170 {offsets = [0, 64], sizes = [8, 32], strides = [1, 1]} : vector<8x96xf32> to vector<8x32xf32>
    %c0_87 = arith.constant 0 : index
    %c0_88 = arith.constant 0 : index
    %176 = vector.load %arg6[%c0_87, %c0_88] : memref<8x32xf32, #tpu.memory_space<vmem>>, vector<8x32xf32>
    %177 = arith.mulf %174, %176 : vector<8x32xf32>
    %178 = arith.mulf %173, %172 : vector<8x32xf32>
    %179 = arith.addf %177, %178 : vector<8x32xf32>
    %c0_89 = arith.constant 0 : index
    %c0_90 = arith.constant 0 : index
    %180 = vector.load %arg6[%c0_89, %c0_90] : memref<8x32xf32, #tpu.memory_space<vmem>>, vector<8x32xf32>
    tpu.vector_store %arg6[%c0_89, %c0_90], %179 {strides = array<i32>} : memref<8x32xf32, #tpu.memory_space<vmem>>, vector<8x32xf32>,
    %181 = math.tanh %179 : vector<8x32xf32>
    %182 = arith.mulf %175, %181 : vector<8x32xf32>
    %c0_91 = arith.constant 0 : index
    %c0_92 = arith.constant 0 : index
    %183 = vector.load %arg5[%c0_91, %c0_92] : memref<8x32xf32, #tpu.memory_space<vmem>>, vector<8x32xf32>
    tpu.vector_store %arg5[%c0_91, %c0_92], %182 {strides = array<i32>} : memref<8x32xf32, #tpu.memory_space<vmem>>, vector<8x32xf32>,
    %184 = arith.cmpi eq, %158, %1 : i32
    %185 = arith.extui %184 : i1 to i32
    %c0_i32_93 = arith.constant 0 : i32
    %186 = arith.cmpi ne, %185, %c0_i32_93 : i32
    scf.if %186 {
      %c0_126 = arith.constant 0 : index
      %c0_127 = arith.constant 0 : index
      %c0_128 = arith.constant 0 : index
      %247 = vector.load %arg4[%c0_126, %c0_127, %c0_128] : memref<1x8x32xf32, #tpu.memory_space<vmem>>, vector<1x8x32xf32>
      %248 = vector.shape_cast %247 : vector<1x8x32xf32> to vector<8x32xf32>
      %249 = vector.shape_cast %182 : vector<8x32xf32> to vector<1x8x32xf32>
      tpu.vector_store %arg4[%c0_126, %c0_127, %c0_128], %249 {strides = array<i32>} : memref<1x8x32xf32, #tpu.memory_space<vmem>>, vector<1x8x32xf32>,
    } else {
    }
    %c6_i32 = arith.constant 6 : i32
    %c8_i32_94 = arith.constant 8 : i32
    %187 = arith.muli %arg1, %c8_i32_94 : i32
    %188 = arith.addi %187, %c6_i32 : i32
    %c0_95 = arith.constant 0 : index
    %c0_96 = arith.constant 0 : index
    %189 = vector.load %arg5[%c0_95, %c0_96] : memref<8x32xf32, #tpu.memory_space<vmem>>, vector<8x32xf32>
    %cst_97 = arith.constant dense<0.000000e+00> : vector<8x128xf32>
    %190 = tpu.matmul %189, %6, %cst_97 {dimension_numbers = #tpu.dot_dimension_numbers<[1], [0], [0], [1], [0, 0, 1, 1], [], []>} : vector<8x32xf32>, vector<32x128xf32>, vector<8x128xf32> -> vector<8x128xf32>
    %c0_98 = arith.constant 0 : index
    %191 = arith.index_cast %c6_i32 : i32 to index
    %c0_99 = arith.constant 0 : index
    %c0_100 = arith.constant 0 : index
    %192 = vector.load %arg2[%c0_98, %191, %c0_99, %c0_100] : memref<1x8x8x128xf32, #tpu.memory_space<vmem>>, vector<1x1x8x128xf32>
    %193 = vector.shape_cast %192 : vector<1x1x8x128xf32> to vector<8x128xf32>
    %194 = arith.addf %193, %190 : vector<8x128xf32>
    %195 = vector.extract_strided_slice %194 {offsets = [0, 0], sizes = [8, 96], strides = [1, 1]} : vector<8x128xf32> to vector<8x96xf32>
    %196 = arith.negf %195 : vector<8x96xf32>
    %197 = math.exp %196 : vector<8x96xf32>
    %cst_101 = arith.constant 1.000000e+00 : f32
    %198 = vector.broadcast %cst_101 : f32 to vector<8x96xf32>
    %199 = arith.addf %198, %197 : vector<8x96xf32>
    %200 = arith.divf %198, %199 : vector<8x96xf32>
    %201 = vector.extract_strided_slice %194 {offsets = [0, 96], sizes = [8, 32], strides = [1, 1]} : vector<8x128xf32> to vector<8x32xf32>
    %202 = math.tanh %201 : vector<8x32xf32>
    %203 = vector.extract_strided_slice %200 {offsets = [0, 0], sizes = [8, 32], strides = [1, 1]} : vector<8x96xf32> to vector<8x32xf32>
    %204 = vector.extract_strided_slice %200 {offsets = [0, 32], sizes = [8, 32], strides = [1, 1]} : vector<8x96xf32> to vector<8x32xf32>
    %205 = vector.extract_strided_slice %200 {offsets = [0, 64], sizes = [8, 32], strides = [1, 1]} : vector<8x96xf32> to vector<8x32xf32>
    %c0_102 = arith.constant 0 : index
    %c0_103 = arith.constant 0 : index
    %206 = vector.load %arg6[%c0_102, %c0_103] : memref<8x32xf32, #tpu.memory_space<vmem>>, vector<8x32xf32>
    %207 = arith.mulf %204, %206 : vector<8x32xf32>
    %208 = arith.mulf %203, %202 : vector<8x32xf32>
    %209 = arith.addf %207, %208 : vector<8x32xf32>
    %c0_104 = arith.constant 0 : index
    %c0_105 = arith.constant 0 : index
    %210 = vector.load %arg6[%c0_104, %c0_105] : memref<8x32xf32, #tpu.memory_space<vmem>>, vector<8x32xf32>
    tpu.vector_store %arg6[%c0_104, %c0_105], %209 {strides = array<i32>} : memref<8x32xf32, #tpu.memory_space<vmem>>, vector<8x32xf32>,
    %211 = math.tanh %209 : vector<8x32xf32>
    %212 = arith.mulf %205, %211 : vector<8x32xf32>
    %c0_106 = arith.constant 0 : index
    %c0_107 = arith.constant 0 : index
    %213 = vector.load %arg5[%c0_106, %c0_107] : memref<8x32xf32, #tpu.memory_space<vmem>>, vector<8x32xf32>
    tpu.vector_store %arg5[%c0_106, %c0_107], %212 {strides = array<i32>} : memref<8x32xf32, #tpu.memory_space<vmem>>, vector<8x32xf32>,
    %214 = arith.cmpi eq, %188, %1 : i32
    %215 = arith.extui %214 : i1 to i32
    %c0_i32_108 = arith.constant 0 : i32
    %216 = arith.cmpi ne, %215, %c0_i32_108 : i32
    scf.if %216 {
      %c0_126 = arith.constant 0 : index
      %c0_127 = arith.constant 0 : index
      %c0_128 = arith.constant 0 : index
      %247 = vector.load %arg4[%c0_126, %c0_127, %c0_128] : memref<1x8x32xf32, #tpu.memory_space<vmem>>, vector<1x8x32xf32>
      %248 = vector.shape_cast %247 : vector<1x8x32xf32> to vector<8x32xf32>
      %249 = vector.shape_cast %212 : vector<8x32xf32> to vector<1x8x32xf32>
      tpu.vector_store %arg4[%c0_126, %c0_127, %c0_128], %249 {strides = array<i32>} : memref<1x8x32xf32, #tpu.memory_space<vmem>>, vector<1x8x32xf32>,
    } else {
    }
    %c7_i32_109 = arith.constant 7 : i32
    %c8_i32_110 = arith.constant 8 : i32
    %217 = arith.muli %arg1, %c8_i32_110 : i32
    %218 = arith.addi %217, %c7_i32_109 : i32
    %c0_111 = arith.constant 0 : index
    %c0_112 = arith.constant 0 : index
    %219 = vector.load %arg5[%c0_111, %c0_112] : memref<8x32xf32, #tpu.memory_space<vmem>>, vector<8x32xf32>
    %cst_113 = arith.constant dense<0.000000e+00> : vector<8x128xf32>
    %220 = tpu.matmul %219, %6, %cst_113 {dimension_numbers = #tpu.dot_dimension_numbers<[1], [0], [0], [1], [0, 0, 1, 1], [], []>} : vector<8x32xf32>, vector<32x128xf32>, vector<8x128xf32> -> vector<8x128xf32>
    %c0_114 = arith.constant 0 : index
    %221 = arith.index_cast %c7_i32_109 : i32 to index
    %c0_115 = arith.constant 0 : index
    %c0_116 = arith.constant 0 : index
    %222 = vector.load %arg2[%c0_114, %221, %c0_115, %c0_116] : memref<1x8x8x128xf32, #tpu.memory_space<vmem>>, vector<1x1x8x128xf32>
    %223 = vector.shape_cast %222 : vector<1x1x8x128xf32> to vector<8x128xf32>
    %224 = arith.addf %223, %220 : vector<8x128xf32>
    %225 = vector.extract_strided_slice %224 {offsets = [0, 0], sizes = [8, 96], strides = [1, 1]} : vector<8x128xf32> to vector<8x96xf32>
    %226 = arith.negf %225 : vector<8x96xf32>
    %227 = math.exp %226 : vector<8x96xf32>
    %cst_117 = arith.constant 1.000000e+00 : f32
    %228 = vector.broadcast %cst_117 : f32 to vector<8x96xf32>
    %229 = arith.addf %228, %227 : vector<8x96xf32>
    %230 = arith.divf %228, %229 : vector<8x96xf32>
    %231 = vector.extract_strided_slice %224 {offsets = [0, 96], sizes = [8, 32], strides = [1, 1]} : vector<8x128xf32> to vector<8x32xf32>
    %232 = math.tanh %231 : vector<8x32xf32>
    %233 = vector.extract_strided_slice %230 {offsets = [0, 0], sizes = [8, 32], strides = [1, 1]} : vector<8x96xf32> to vector<8x32xf32>
    %234 = vector.extract_strided_slice %230 {offsets = [0, 32], sizes = [8, 32], strides = [1, 1]} : vector<8x96xf32> to vector<8x32xf32>
    %235 = vector.extract_strided_slice %230 {offsets = [0, 64], sizes = [8, 32], strides = [1, 1]} : vector<8x96xf32> to vector<8x32xf32>
    %c0_118 = arith.constant 0 : index
    %c0_119 = arith.constant 0 : index
    %236 = vector.load %arg6[%c0_118, %c0_119] : memref<8x32xf32, #tpu.memory_space<vmem>>, vector<8x32xf32>
    %237 = arith.mulf %234, %236 : vector<8x32xf32>
    %238 = arith.mulf %233, %232 : vector<8x32xf32>
    %239 = arith.addf %237, %238 : vector<8x32xf32>
    %c0_120 = arith.constant 0 : index
    %c0_121 = arith.constant 0 : index
    %240 = vector.load %arg6[%c0_120, %c0_121] : memref<8x32xf32, #tpu.memory_space<vmem>>, vector<8x32xf32>
    tpu.vector_store %arg6[%c0_120, %c0_121], %239 {strides = array<i32>} : memref<8x32xf32, #tpu.memory_space<vmem>>, vector<8x32xf32>,
    %241 = math.tanh %239 : vector<8x32xf32>
    %242 = arith.mulf %235, %241 : vector<8x32xf32>
    %c0_122 = arith.constant 0 : index
    %c0_123 = arith.constant 0 : index
    %243 = vector.load %arg5[%c0_122, %c0_123] : memref<8x32xf32, #tpu.memory_space<vmem>>, vector<8x32xf32>
    tpu.vector_store %arg5[%c0_122, %c0_123], %242 {strides = array<i32>} : memref<8x32xf32, #tpu.memory_space<vmem>>, vector<8x32xf32>,
    %244 = arith.cmpi eq, %218, %1 : i32
    %245 = arith.extui %244 : i1 to i32
    %c0_i32_124 = arith.constant 0 : i32
    %246 = arith.cmpi ne, %245, %c0_i32_124 : i32
    scf.if %246 {
      %c0_126 = arith.constant 0 : index
      %c0_127 = arith.constant 0 : index
      %c0_128 = arith.constant 0 : index
      %247 = vector.load %arg4[%c0_126, %c0_127, %c0_128] : memref<1x8x32xf32, #tpu.memory_space<vmem>>, vector<1x8x32xf32>
      %248 = vector.shape_cast %247 : vector<1x8x32xf32> to vector<8x32xf32>
      %249 = vector.shape_cast %242 : vector<8x32xf32> to vector<1x8x32xf32>
      tpu.vector_store %arg4[%c0_126, %c0_127, %c0_128], %249 {strides = array<i32>} : memref<1x8x32xf32, #tpu.memory_space<vmem>>, vector<1x8x32xf32>,
    } else {
    }
    %c8_i32_125 = arith.constant 8 : i32
    return
  }
  func.func @transform_0(%arg0: i32, %arg1: i32) -> (i32, i32, i32, i32) {
    %c0_i32 = arith.constant 0 : i32
    %c0_i32_0 = arith.constant 0 : i32
    %c0_i32_1 = arith.constant 0 : i32
    return %arg0, %arg1, %c0_i32, %c0_i32_0 : i32, i32, i32, i32
  }
  func.func @transform_1(%arg0: i32, %arg1: i32) -> (i32, i32, i32) {
    %c0_i32 = arith.constant 0 : i32
    %c0_i32_0 = arith.constant 0 : i32
    %c0_i32_1 = arith.constant 0 : i32
    return %arg0, %c0_i32, %c0_i32_0 : i32, i32, i32
  }
  func.func @transform_2(%arg0: i32, %arg1: i32) -> (i32, i32, i32) {
    %c0_i32 = arith.constant 0 : i32
    %c0_i32_0 = arith.constant 0 : i32
    %c0_i32_1 = arith.constant 0 : i32
    return %arg0, %c0_i32, %c0_i32_0 : i32, i32, i32
  }
}

</mosaic_0001>

<llo_original>
// kernel: sentence_classification_forward.1
$region0: #{sentence_classification_forward.1}
  #allocation0 [shape = 'u32[]', space=smem, size = 0x4, offset = 0x4, fixed_abs, tag = 'smem constant byte address 0x4 - core index']
  #allocation1 [shape = 'u32[144,128]{1,0:T(1,128)}', space=vmem, size = 0x12000, scoped, tag = 'internal scratch']
  #allocation2 [shape = 'f32[8,32]{1,0:T(8,128)}', space=vmem, size = 0x1000, scoped, tag = 'scratch operand']
  #allocation3 [shape = 'f32[8,32]{1,0:T(8,128)}', space=vmem, size = 0x1000, scoped, tag = 'scratch operand']
  %s0 = inlined_call_operand.hbm [shape: f32[2,8,8,128], index: 0, kind: input, shape index: {}]
  %s1 = inlined_call_operand.hbm [shape: f32[2,32,128], index: 1, kind: input, shape index: {}]
  %s2 = inlined_call_operand.hbm [shape: f32[2,8,32], index: 2, kind: output, shape index: {}]
  %s3 = sld [smem:[#allocation0]]
  $region85: #{sentence_classification_forward.1} parent=0
    _
  %s5 = ssub.s32 1, %s3
  %s6 = scalar_select 0, %s5, %s3
  $region1: #{sentence_classification_forward.1} parent=0
    #allocation4 [shape = 'u8[65536]{0}', space=vmem, size = 0x10000, scoped, tag = 'input window, operand 0']
    #allocation5 [shape = 's32[2]{0}', space=sflag, size = 0x8, scoped, tag = 'scoped memory for sentence_classification_forward.1']
    #allocation6 [shape = 's32[2]{0}', space=sflag, size = 0x8, scoped, tag = 'scoped memory for sentence_classification_forward.1']
    #allocation7 [shape = 'u8[32768]{0}', space=vmem, size = 0x8000, scoped, tag = 'input window, operand 1']
    #allocation8 [shape = 's32[2]{0}', space=sflag, size = 0x8, scoped, tag = 'scoped memory for sentence_classification_forward.1']
    #allocation9 [shape = 'u8[8192]{0}', space=vmem, size = 0x2000, scoped, tag = 'output window, operand 0']
    %7 = vsyncpa [#allocation5], 0
    %s8 = scalar_lea.sflag [#allocation5], 1
    %9 = vsyncpa %s8, 0
    %10 = vsyncpa [#allocation8], 0
    %s11 = scalar_lea.sflag [#allocation8], 1
    %12 = vsyncpa %s11, 0
    %13 = vsyncpa [#allocation6], 0
    %s14 = scalar_lea.sflag [#allocation6], 1
    %15 = vsyncpa %s14, 0
    loop: start=0, step=1, limit=4
    $region2: #{sentence_classification_forward.1} parent=1 // loop_pre_header
      _
    $region3: #{sentence_classification_forward.1} parent=1 // loop_header
      %s17 = sphi 0, %s21
      %p18 = scmp.ge.s32.totalorder %s17, 4
      %s24 = sphi 0, %s36
      %s25 = sphi 0, %s32
      %s26 = sphi 0, %s24
      %s27 = sphi 0, %s25
      %s28 = sphi 0, %s26
      %s29 = sphi 0, %s27
      %s41 = sphi 0, %s43
      %s44 = sphi 0, %s41
      %s45 = sphi 0, %s44
      %s61 = sphi 0, %s45
      %s67 = sphi 0, %s69
      %s70 = sphi 0, %s67
      %s71 = sphi 0, %s70
      %s87 = sphi 0, %s71
      %s93 = sphi 0, %s95
      %s96 = sphi 0, %s93
      %s97 = sphi 0, %s96
      %s113 = sphi 0, %s97
    $region4: #{sentence_classification_forward.1} parent=1 // loop_header_branch
      %20 = sbr.rel (%p18) target = $region8
    $region5: #{sentence_classification_forward.1} parent=1 // loop_body
      %s22 = ssub.s32 %s17, 1
      %s23 = ssub.s32 %s17, 2
      %s30 = sadd.s32 1, %s25
      %p31 = scmp.ge.s32.totalorder %s30, 1
      %s32 = scalar_select %p31, 0, %s30
      %s33 = sadd.s32 1, %s24
      %s34 = scalar_select %p31, %s33, %s24
      %p35 = scmp.ge.s32.totalorder %s34, 2
      %s36 = scalar_select %p35, 0, %s34
      %s37 = ssub.s32 %s24, %s36
      %s38 = ssub.s32 %s25, %s32
      %s39 = sor.u32 %s37, %s38
      %p40 = scmp.eq.s32.totalorder %s39, 0
      %s42 = sadd.s32 %s41, 1
      %s43 = scalar_select %p40, %s41, %s42
      %p46 = pneg %p40
      %p47 = scmp.eq.s32.totalorder %s17, 1
      %p48 = por %p46, %p47
      %p49 = scmp.ne.s32.totalorder %s41, %s44
      %p50 = scmp.eq.s32.totalorder %s17, 0
      %p51 = por %p49, %p50
      %p52 = scmp.ne.s32.totalorder %s41, %s44
      %p53 = scmp.eq.s32.totalorder %s22, 1
      %p54 = por %p52, %p53
      %p55 = scmp.ne.s32.totalorder %s44, %s45
      %p56 = scmp.eq.s32.totalorder %s22, 0
      %p57 = por %p55, %p56
      %p58 = scmp.ne.s32.totalorder %s44, %s45
      %p59 = scmp.eq.s32.totalorder %s23, 1
      %p60 = por %p58, %p59
      %p62 = scmp.ne.s32.totalorder %s45, %s61
      %p63 = scmp.eq.s32.totalorder %s23, 0
      %p64 = por %p62, %p63
      %s65 = ssub.s32 %s24, %s36
      %p66 = scmp.eq.s32.totalorder %s65, 0
      %s68 = sadd.s32 %s67, 1
      %s69 = scalar_select %p66, %s67, %s68
      %p72 = pneg %p66
      %p73 = scmp.eq.s32.totalorder %s17, 1
      %p74 = por %p72, %p73
      %p75 = scmp.ne.s32.totalorder %s67, %s70
      %p76 = scmp.eq.s32.totalorder %s17, 0
      %p77 = por %p75, %p76
      %p78 = scmp.ne.s32.totalorder %s67, %s70
      %p79 = scmp.eq.s32.totalorder %s22, 1
      %p80 = por %p78, %p79
      %p81 = scmp.ne.s32.totalorder %s70, %s71
      %p82 = scmp.eq.s32.totalorder %s22, 0
      %p83 = por %p81, %p82
      %p84 = scmp.ne.s32.totalorder %s70, %s71
      %p85 = scmp.eq.s32.totalorder %s23, 1
      %p86 = por %p84, %p85
      %p88 = scmp.ne.s32.totalorder %s71, %s87
      %p89 = scmp.eq.s32.totalorder %s23, 0
      %p90 = por %p88, %p89
      %s91 = ssub.s32 %s24, %s36
      %p92 = scmp.eq.s32.totalorder %s91, 0
      %s94 = sadd.s32 %s93, 1
      %s95 = scalar_select %p92, %s93, %s94
      %p98 = pneg %p92
      %p99 = scmp.eq.s32.totalorder %s17, 1
      %p100 = por %p98, %p99
      %p101 = scmp.ne.s32.totalorder %s93, %s96
      %p102 = scmp.eq.s32.totalorder %s17, 0
      %p103 = por %p101, %p102
      %p104 = scmp.ne.s32.totalorder %s93, %s96
      %p105 = scmp.eq.s32.totalorder %s22, 1
      %p106 = por %p104, %p105
      %p107 = scmp.ne.s32.totalorder %s96, %s97
      %p108 = scmp.eq.s32.totalorder %s22, 0
      %p109 = por %p107, %p108
      %p110 = scmp.ne.s32.totalorder %s96, %s97
      %p111 = scmp.eq.s32.totalorder %s23, 1
      %p112 = por %p110, %p111
      %p114 = scmp.ne.s32.totalorder %s97, %s113
      %p115 = scmp.eq.s32.totalorder %s23, 0
      %p116 = por %p114, %p115
      %p117 = scmp.le.s32.totalorder 1, %s17
      %p118 = scmp.lt.s32.totalorder %s17, 3
      %p119 = pnand %p117, %p118
      %p120 = pneg %p119
      // Predicated region
      $region9: #{sentence_classification_forward.1} parent=5 // pred_check
        _
      $region10: #{sentence_classification_forward.1} parent=5 // pred_check_branch
        %122 = sbr.rel (%p119) target = $region12
      $region11: #{sentence_classification_forward.1} parent=5 // pred_region
        %s123 = ssub.s32 %s17, 1
      $region12: #{sentence_classification_forward.1} parent=5 // pred_fallthru
        _
      %p124 = scmp.lt.s32.totalorder %s17, 2
      // Predicated region
      $region13: #{sentence_classification_forward.1} parent=5 // pred_check
        %p125 = pneg %p124
      $region14: #{sentence_classification_forward.1} parent=5 // pred_check_branch
        %127 = sbr.rel (%p125) target = $region16
      $region15: #{sentence_classification_forward.1} parent=5 // pred_region
        // Predicated region
        $region17: #{sentence_classification_forward.1} parent=15 // pred_check
          %p128 = pneg %p51
        $region18: #{sentence_classification_forward.1} parent=15 // pred_check_branch
          %130 = sbr.rel (%p128) target = $region20
        $region19: #{sentence_classification_forward.1} parent=15 // pred_region
          %s131 = sand.u32 %s41, 1
          %s132 = scalar_lea.sflag [#allocation5], %s131
          %s133 = sand.u32 %s41, 1
          %s134 = smul.addr %s133, 64
          %s135 = scalar_lea.vmem [#allocation4], %s134
          %s136 = smul.u32 8, %s25
          %s138 = ssub.s32 1024, 1024
          %139 = vsyncadd %s132, %s138
          %s140 = smul.addr %s24, 8
          %s141 = sadd.s32 %s136, %s140
          %s142 = smul.addr %s141, 128
          %s143 = scalar_lea.hbm %s0, %s142
          %s144 = sshll.u32 %s135, 4
          %s145 = int_to_ptr.vmem [resolvable:$true] %s144
          %150 = dma.hbm_to_vmem [thread:$0]  %s143, 1024, %s145, %s132, 128, 128, 8
        $region20: #{sentence_classification_forward.1} parent=15 // pred_fallthru
          _
        // Predicated region
        $region21: #{sentence_classification_forward.1} parent=15 // pred_check
          %p151 = pneg %p77
        $region22: #{sentence_classification_forward.1} parent=15 // pred_check_branch
          %153 = sbr.rel (%p151) target = $region24
        $region23: #{sentence_classification_forward.1} parent=15 // pred_region
          %s154 = sand.u32 %s67, 1
          %s155 = scalar_lea.sflag [#allocation8], %s154
          %s156 = sand.u32 %s67, 1
          %s157 = smul.addr %s156, 32
          %s158 = scalar_lea.vmem [#allocation7], %s157
          %s160 = ssub.s32 512, 512
          %161 = vsyncadd %s155, %s160
          %s162 = smul.addr %s24, 4
          %s163 = smul.addr %s162, 128
          %s164 = scalar_lea.hbm %s1, %s163
          %s165 = sshll.u32 %s158, 4
          %s166 = int_to_ptr.vmem [resolvable:$true] %s165
          %171 = dma.hbm_to_vmem [thread:$0]  %s164, 512, %s166, %s155, 128, 128, 8
        $region24: #{sentence_classification_forward.1} parent=15 // pred_fallthru
          _
      $region16: #{sentence_classification_forward.1} parent=5 // pred_fallthru
        _
      %p172 = scmp.le.s32.totalorder 1, %s17
      %p173 = scmp.lt.s32.totalorder %s17, 3
      %p174 = pnand %p172, %p173
      %p175 = pneg %p174
      // Predicated region
      $region25: #{sentence_classification_forward.1} parent=5 // pred_check
        _
      $region26: #{sentence_classification_forward.1} parent=5 // pred_check_branch
        %177 = sbr.rel (%p174) target = $region28
      $region27: #{sentence_classification_forward.1} parent=5 // pred_region
        %s178 = ssub.s32 %s17, 1
        %s179 = sand.u32 %s44, 1
        %s180 = scalar_lea.sflag [#allocation5], %s179
        %s181 = sand.u32 %s44, 1
        %s182 = smul.addr %s181, 64
        %s183 = scalar_lea.vmem [#allocation4], %s182
        // Predicated region
        $region29: #{sentence_classification_forward.1} parent=27 // pred_check
          %p184 = pneg %p57
        $region30: #{sentence_classification_forward.1} parent=27 // pred_check_branch
          %186 = sbr.rel (%p184) target = $region32
        $region31: #{sentence_classification_forward.1} parent=27 // pred_region
          %187 = dma.done %s180, 1024
        $region32: #{sentence_classification_forward.1} parent=27 // pred_fallthru
          _
        %s188 = sand.u32 %s70, 1
        %s189 = scalar_lea.sflag [#allocation8], %s188
        %s190 = sand.u32 %s70, 1
        %s191 = smul.addr %s190, 32
        %s192 = scalar_lea.vmem [#allocation7], %s191
        // Predicated region
        $region33: #{sentence_classification_forward.1} parent=27 // pred_check
          %p193 = pneg %p83
        $region34: #{sentence_classification_forward.1} parent=27 // pred_check_branch
          %195 = sbr.rel (%p193) target = $region36
        $region35: #{sentence_classification_forward.1} parent=27 // pred_region
          %196 = dma.done %s189, 512
        $region36: #{sentence_classification_forward.1} parent=27 // pred_fallthru
          _
        %s197 = sand.u32 %s44, 1
        %s198 = scalar_lea.sflag [#allocation5], %s197
        %s199 = sand.u32 %s44, 1
        %s200 = smul.addr %s199, 64
        %s201 = scalar_lea.vmem [#allocation4], %s200
        %p202 = pneg %p57
        %p203 = pneg %p54
        %s204 = sand.u32 %s70, 1
        %s205 = scalar_lea.sflag [#allocation8], %s204
        %s206 = sand.u32 %s70, 1
        %s207 = smul.addr %s206, 32
        %s208 = scalar_lea.vmem [#allocation7], %s207
        %p209 = pneg %p83
        %p210 = pneg %p80
        %p211 = pneg %p109
        %p212 = pneg %p106
        %s213 = sand.u32 %s96, 1
        %s214 = scalar_lea.sflag [#allocation6], %s213
        %s215 = sand.u32 %s96, 1
        %s216 = smul.addr %s215, 8
        %s217 = scalar_lea.vmem [#allocation9], %s216
        %s218 = smul.u32 8, %s27
        %p219 = scmp.eq.s32.totalorder %s26, 0
        %s220 = scalar_select %p219, 7, 0
        %p221 = scmp.eq.s32.totalorder %s27, 0
        // Predicated region
        $region37: #{sentence_classification_forward.1} parent=27 // pred_check
          %p222 = pneg %p221
        $region38: #{sentence_classification_forward.1} parent=27 // pred_check_branch
          %224 = sbr.rel (%p222) target = $region40
        $region39: #{sentence_classification_forward.1} parent=27 // pred_region
          %vm225 = vcmask 261120
          %226 = vst.msk [vmem:[#allocation2] sm:$0xff] %vm225, 0.0
          %227 = vst.msk [vmem:[#allocation3] sm:$0xff] %vm225, 0.0
        $region40: #{sentence_classification_forward.1} parent=27 // pred_fallthru
          _
        %v228 = vld [vmem:[%s192] sm:$0xff]
        %v229 = vld [vmem:[%s192 + $0x8] sm:$0xff]
        %v230 = vld [vmem:[%s192 + $0x10] sm:$0xff]
        %v231 = vld [vmem:[%s192 + $0x18] sm:$0xff]
        %s232 = smul.u32 %s27, 8
        %v233 = vld [vmem:[#allocation2] sm:$0xff]
        %vm234 = vcmask 261120
        %v236 = vsel %vm234, %v233, 0
        %238 = vmatprep.subr.mxu0 0.0
        %239 = vmatpush1.msra.mxu0 %v228
        %240 = vmatprep.subr.mxu0 0.0
        %241 = vmatpush1.msra.mxu0 %v229
        %242 = vmatprep.subr.mxu0 0.0
        %243 = vmatpush1.msra.mxu0 %v230
        %244 = vmatprep.subr.mxu0 0.0
        %245 = vmatpush1.msra.mxu0 %v231
        %246 = vmatprep.subr.mxu0 0.0
        %247 = vmatpush1.msra.mxu0 0.0
        %248 = vmatprep.subr.mxu0 0.0
        %249 = vmatpush1.msra.mxu0 0.0
        %250 = vmatprep.subr.mxu0 0.0
        %251 = vmatpush1.msra.mxu0 0.0
        %252 = vmatprep.subr.mxu0 0.0
        %253 = vmatpush1.msra.mxu0 0.0
        %254 = vmatprep.subr.mxu0 0.0
        %255 = vmatpush1.msra.mxu0 0.0
        %256 = vmatprep.subr.mxu0 0.0
        %257 = vmatpush1.msra.mxu0 0.0
        %258 = vmatprep.subr.mxu0 0.0
        %259 = vmatpush1.msra.mxu0 0.0
        %260 = vmatprep.subr.mxu0 0.0
        %261 = vmatpush1.msra.mxu0 0.0
        %262 = vmatprep.subr.mxu0 0.0
        %263 = vmatpush1.msra.mxu0 0.0
        %264 = vmatprep.subr.mxu0 0.0
        %265 = vmatpush1.msra.mxu0 0.0
        %266 = vmatprep.subr.mxu0 0.0
        %267 = vmatpush1.msra.mxu0 0.0
        %268 = vmatprep.subr.mxu0 0.0
        %269 = vmatpush1.msra.mxu0 0.0
        %270 = vmatprep.subr.mxu0 0.0
        %271 = vmatpush1.msra.mxu0 0.0
        %272 = vmatprep.subr.mxu0 0.0
        %273 = vmatpush1.msra.mxu0 0.0
        %274 = vmatprep.subr.mxu0 0.0
        %275 = vmatpush1.msra.mxu0 0.0
        %276 = vmatprep.subr.mxu0 0.0
        %277 = vmatpush1.msra.mxu0 0.0
        %278 = vmatprep.subr.mxu0 0.0
        %279 = vmatpush1.msra.mxu0 0.0
        %280 = vmatprep.subr.mxu0 0.0
        %281 = vmatpush1.msra.mxu0 0.0
        %282 = vmatprep.subr.mxu0 0.0
        %283 = vmatpush1.msra.mxu0 0.0
        %284 = vmatprep.subr.mxu0 0.0
        %285 = vmatpush1.msra.mxu0 0.0
        %286 = vmatprep.subr.mxu0 0.0
        %287 = vmatpush1.msra.mxu0 0.0
        %288 = vmatprep.subr.mxu0 0.0
        %289 = vmatpush1.msra.mxu0 0.0
        %290 = vmatprep.subr.mxu0 0.0
        %291 = vmatpush1.msra.mxu0 0.0
        %292 = vmatprep.subr.mxu0 0.0
        %293 = vmatpush1.msra.mxu0 0.0
        %294 = vmatprep.subr.mxu0 0.0
        %295 = vmatpush1.msra.mxu0 0.0
        %296 = vmatprep.subr.mxu0 0.0
        %297 = vmatpush1.msra.mxu0 0.0
        %298 = vmatprep.subr.mxu0 0.0
        %299 = vmatpush1.msra.mxu0 0.0
        %300 = vmatprep.subr.mxu0 0.0
        %301 = vmatpush1.msra.mxu0 0.0
        %302 = vmatprep.mubr.f32.mxu0 0.0
        %303 = vmatmul.mubr.f32.gmra.mrb[0].mxu0 %v236
        %v304 = vpop.f32.mrb[0].mxu0
        %v305 = vadd.f32 0.0, %v304
        %v306 = vpop.f32.mrb[0].mxu0
        %307 = vdwg.mxu0
        %v308 = vld [vmem:[%s183] sm:$0xff]
        %v309 = vadd.f32 %v308, %v305
        %v310 = vxor.u32 %v309, 2147483648
        %v311 = vmul.f32 %v310, 1.442695
        %v312 = vpow.pop %v311
        %v313 = vadd.f32 %v312, 1.0
        %v314 = vrcp.pop %v313
        %v315 = vmul.f32 1.0, %v314
        %v316 = vtanh.pop %v309
        %v317 = vld [vmem:[#allocation3] sm:$0xff]
        %319 = vrot.lane.b32.xlu0 %v317, 32
        %v320 = vpop.permute.xlu0 %319
        %v322 = vmul.f32 %v315, %v320
        %324 = vrot.lane.b32.xlu0 %v316, 32
        %v325 = vpop.permute.xlu0 %324
        %v327 = vmul.f32 %v315, %v325
        %329 = vrot.lane.b32.xlu0 %v327, 32
        %v330 = vpop.permute.xlu0 %329
        %v332 = vadd.f32 %v322, %v330
        %334 = vrot.lane.b32.xlu0 %v332, 96
        %v335 = vpop.permute.xlu0 %334
        %337 = vst.msk [vmem:[#allocation3] sm:$0xff] %vm234, %v335
        %v338 = vtanh.pop %v332
        %340 = vrot.lane.b32.xlu0 %v338, 32
        %v341 = vpop.permute.xlu0 %340
        %v343 = vmul.f32 %v315, %v341
        %345 = vrot.lane.b32.xlu0 %v343, 64
        %v346 = vpop.permute.xlu0 %345
        %348 = vst.msk [vmem:[#allocation2] sm:$0xff] %vm234, %v346
        %p349 = scmp.eq.s32.totalorder %s232, %s220
        // Predicated region
        $region41: #{sentence_classification_forward.1} parent=27 // pred_check
          %p350 = pneg %p349
        $region42: #{sentence_classification_forward.1} parent=27 // pred_check_branch
          %352 = sbr.rel (%p350) target = $region44
        $region43: #{sentence_classification_forward.1} parent=27 // pred_region
          %353 = vst.msk [vmem:[%s217] sm:$0xff] %vm234, %v346
        $region44: #{sentence_classification_forward.1} parent=27 // pred_fallthru
          _
        %s354 = sadd.s32 %s232, 1
        %v355 = vld [vmem:[#allocation2] sm:$0xff]
        %v357 = vsel %vm234, %v355, 0
        %359 = vmatprep.subr.mxu0 0.0
        %360 = vmatpush1.msra.mxu0 %v228
        %361 = vmatprep.subr.mxu0 0.0
        %362 = vmatpush1.msra.mxu0 %v229
        %363 = vmatprep.subr.mxu0 0.0
        %364 = vmatpush1.msra.mxu0 %v230
        %365 = vmatprep.subr.mxu0 0.0
        %366 = vmatpush1.msra.mxu0 %v231
        %367 = vmatprep.subr.mxu0 0.0
        %368 = vmatpush1.msra.mxu0 0.0
        %369 = vmatprep.subr.mxu0 0.0
        %370 = vmatpush1.msra.mxu0 0.0
        %371 = vmatprep.subr.mxu0 0.0
        %372 = vmatpush1.msra.mxu0 0.0
        %373 = vmatprep.subr.mxu0 0.0
        %374 = vmatpush1.msra.mxu0 0.0
        %375 = vmatprep.subr.mxu0 0.0
        %376 = vmatpush1.msra.mxu0 0.0
        %377 = vmatprep.subr.mxu0 0.0
        %378 = vmatpush1.msra.mxu0 0.0
        %379 = vmatprep.subr.mxu0 0.0
        %380 = vmatpush1.msra.mxu0 0.0
        %381 = vmatprep.subr.mxu0 0.0
        %382 = vmatpush1.msra.mxu0 0.0
        %383 = vmatprep.subr.mxu0 0.0
        %384 = vmatpush1.msra.mxu0 0.0
        %385 = vmatprep.subr.mxu0 0.0
        %386 = vmatpush1.msra.mxu0 0.0
        %387 = vmatprep.subr.mxu0 0.0
        %388 = vmatpush1.msra.mxu0 0.0
        %389 = vmatprep.subr.mxu0 0.0
        %390 = vmatpush1.msra.mxu0 0.0
        %391 = vmatprep.subr.mxu0 0.0
        %392 = vmatpush1.msra.mxu0 0.0
        %393 = vmatprep.subr.mxu0 0.0
        %394 = vmatpush1.msra.mxu0 0.0
        %395 = vmatprep.subr.mxu0 0.0
        %396 = vmatpush1.msra.mxu0 0.0
        %397 = vmatprep.subr.mxu0 0.0
        %398 = vmatpush1.msra.mxu0 0.0
        %399 = vmatprep.subr.mxu0 0.0
        %400 = vmatpush1.msra.mxu0 0.0
        %401 = vmatprep.subr.mxu0 0.0
        %402 = vmatpush1.msra.mxu0 0.0
        %403 = vmatprep.subr.mxu0 0.0
        %404 = vmatpush1.msra.mxu0 0.0
        %405 = vmatprep.subr.mxu0 0.0
        %406 = vmatpush1.msra.mxu0 0.0
        %407 = vmatprep.subr.mxu0 0.0
        %408 = vmatpush1.msra.mxu0 0.0
        %409 = vmatprep.subr.mxu0 0.0
        %410 = vmatpush1.msra.mxu0 0.0
        %411 = vmatprep.subr.mxu0 0.0
        %412 = vmatpush1.msra.mxu0 0.0
        %413 = vmatprep.subr.mxu0 0.0
        %414 = vmatpush1.msra.mxu0 0.0
        %415 = vmatprep.subr.mxu0 0.0
        %416 = vmatpush1.msra.mxu0 0.0
        %417 = vmatprep.subr.mxu0 0.0
        %418 = vmatpush1.msra.mxu0 0.0
        %419 = vmatprep.subr.mxu0 0.0
        %420 = vmatpush1.msra.mxu0 0.0
        %421 = vmatprep.subr.mxu0 0.0
        %422 = vmatpush1.msra.mxu0 0.0
        %423 = vmatprep.mubr.f32.mxu0 0.0
        %424 = vmatmul.mubr.f32.gmra.mrb[0].mxu0 %v357
        %v425 = vpop.f32.mrb[0].mxu0
        %v426 = vadd.f32 0.0, %v425
        %v427 = vpop.f32.mrb[0].mxu0
        %428 = vdwg.mxu0
        %s429 = scalar_lea.vmem %s183, 8 [#allocation4]
        %v430 = vld [vmem:[%s429] sm:$0xff]
        %v431 = vadd.f32 %v430, %v426
        %v432 = vxor.u32 %v431, 2147483648
        %v433 = vmul.f32 %v432, 1.442695
        %v434 = vpow.pop %v433
        %v435 = vadd.f32 %v434, 1.0
        %v436 = vrcp.pop %v435
        %v437 = vmul.f32 1.0, %v436
        %v438 = vtanh.pop %v431
        %v439 = vld [vmem:[#allocation3] sm:$0xff]
        %441 = vrot.lane.b32.xlu0 %v439, 32
        %v442 = vpop.permute.xlu0 %441
        %v444 = vmul.f32 %v437, %v442
        %446 = vrot.lane.b32.xlu0 %v438, 32
        %v447 = vpop.permute.xlu0 %446
        %v449 = vmul.f32 %v437, %v447
        %451 = vrot.lane.b32.xlu0 %v449, 32
        %v452 = vpop.permute.xlu0 %451
        %v454 = vadd.f32 %v444, %v452
        %456 = vrot.lane.b32.xlu0 %v454, 96
        %v457 = vpop.permute.xlu0 %456
        %459 = vst.msk [vmem:[#allocation3] sm:$0xff] %vm234, %v457
        %v460 = vtanh.pop %v454
        %462 = vrot.lane.b32.xlu0 %v460, 32
        %v463 = vpop.permute.xlu0 %462
        %v465 = vmul.f32 %v437, %v463
        %467 = vrot.lane.b32.xlu0 %v465, 64
        %v468 = vpop.permute.xlu0 %467
        %470 = vst.msk [vmem:[#allocation2] sm:$0xff] %vm234, %v468
        %p471 = scmp.eq.s32.totalorder %s354, %s220
        // Predicated region
        $region45: #{sentence_classification_forward.1} parent=27 // pred_check
          %p472 = pneg %p471
        $region46: #{sentence_classification_forward.1} parent=27 // pred_check_branch
          %474 = sbr.rel (%p472) target = $region48
        $region47: #{sentence_classification_forward.1} parent=27 // pred_region
          %475 = vst.msk [vmem:[%s217] sm:$0xff] %vm234, %v468
        $region48: #{sentence_classification_forward.1} parent=27 // pred_fallthru
          _
        %s476 = sadd.s32 %s232, 2
        %v477 = vld [vmem:[#allocation2] sm:$0xff]
        %v479 = vsel %vm234, %v477, 0
        %481 = vmatprep.subr.mxu0 0.0
        %482 = vmatpush1.msra.mxu0 %v228
        %483 = vmatprep.subr.mxu0 0.0
        %484 = vmatpush1.msra.mxu0 %v229
        %485 = vmatprep.subr.mxu0 0.0
        %486 = vmatpush1.msra.mxu0 %v230
        %487 = vmatprep.subr.mxu0 0.0
        %488 = vmatpush1.msra.mxu0 %v231
        %489 = vmatprep.subr.mxu0 0.0
        %490 = vmatpush1.msra.mxu0 0.0
        %491 = vmatprep.subr.mxu0 0.0
        %492 = vmatpush1.msra.mxu0 0.0
        %493 = vmatprep.subr.mxu0 0.0
        %494 = vmatpush1.msra.mxu0 0.0
        %495 = vmatprep.subr.mxu0 0.0
        %496 = vmatpush1.msra.mxu0 0.0
        %497 = vmatprep.subr.mxu0 0.0
        %498 = vmatpush1.msra.mxu0 0.0
        %499 = vmatprep.subr.mxu0 0.0
        %500 = vmatpush1.msra.mxu0 0.0
        %501 = vmatprep.subr.mxu0 0.0
        %502 = vmatpush1.msra.mxu0 0.0
        %503 = vmatprep.subr.mxu0 0.0
        %504 = vmatpush1.msra.mxu0 0.0
        %505 = vmatprep.subr.mxu0 0.0
        %506 = vmatpush1.msra.mxu0 0.0
        %507 = vmatprep.subr.mxu0 0.0
        %508 = vmatpush1.msra.mxu0 0.0
        %509 = vmatprep.subr.mxu0 0.0
        %510 = vmatpush1.msra.mxu0 0.0
        %511 = vmatprep.subr.mxu0 0.0
        %512 = vmatpush1.msra.mxu0 0.0
        %513 = vmatprep.subr.mxu0 0.0
        %514 = vmatpush1.msra.mxu0 0.0
        %515 = vmatprep.subr.mxu0 0.0
        %516 = vmatpush1.msra.mxu0 0.0
        %517 = vmatprep.subr.mxu0 0.0
        %518 = vmatpush1.msra.mxu0 0.0
        %519 = vmatprep.subr.mxu0 0.0
        %520 = vmatpush1.msra.mxu0 0.0
        %521 = vmatprep.subr.mxu0 0.0
        %522 = vmatpush1.msra.mxu0 0.0
        %523 = vmatprep.subr.mxu0 0.0
        %524 = vmatpush1.msra.mxu0 0.0
        %525 = vmatprep.subr.mxu0 0.0
        %526 = vmatpush1.msra.mxu0 0.0
        %527 = vmatprep.subr.mxu0 0.0
        %528 = vmatpush1.msra.mxu0 0.0
        %529 = vmatprep.subr.mxu0 0.0
        %530 = vmatpush1.msra.mxu0 0.0
        %531 = vmatprep.subr.mxu0 0.0
        %532 = vmatpush1.msra.mxu0 0.0
        %533 = vmatprep.subr.mxu0 0.0
        %534 = vmatpush1.msra.mxu0 0.0
        %535 = vmatprep.subr.mxu0 0.0
        %536 = vmatpush1.msra.mxu0 0.0
        %537 = vmatprep.subr.mxu0 0.0
        %538 = vmatpush1.msra.mxu0 0.0
        %539 = vmatprep.subr.mxu0 0.0
        %540 = vmatpush1.msra.mxu0 0.0
        %541 = vmatprep.subr.mxu0 0.0
        %542 = vmatpush1.msra.mxu0 0.0
        %543 = vmatprep.subr.mxu0 0.0
        %544 = vmatpush1.msra.mxu0 0.0
        %545 = vmatprep.mubr.f32.mxu0 0.0
        %546 = vmatmul.mubr.f32.gmra.mrb[0].mxu0 %v479
        %v547 = vpop.f32.mrb[0].mxu0
        %v548 = vadd.f32 0.0, %v547
        %v549 = vpop.f32.mrb[0].mxu0
        %550 = vdwg.mxu0
        %s551 = scalar_lea.vmem %s183, 16 [#allocation4]
        %v552 = vld [vmem:[%s551] sm:$0xff]
        %v553 = vadd.f32 %v552, %v548
        %v554 = vxor.u32 %v553, 2147483648
        %v555 = vmul.f32 %v554, 1.442695
        %v556 = vpow.pop %v555
        %v557 = vadd.f32 %v556, 1.0
        %v558 = vrcp.pop %v557
        %v559 = vmul.f32 1.0, %v558
        %v560 = vtanh.pop %v553
        %v561 = vld [vmem:[#allocation3] sm:$0xff]
        %563 = vrot.lane.b32.xlu0 %v561, 32
        %v564 = vpop.permute.xlu0 %563
        %v566 = vmul.f32 %v559, %v564
        %568 = vrot.lane.b32.xlu0 %v560, 32
        %v569 = vpop.permute.xlu0 %568
        %v571 = vmul.f32 %v559, %v569
        %573 = vrot.lane.b32.xlu0 %v571, 32
        %v574 = vpop.permute.xlu0 %573
        %v576 = vadd.f32 %v566, %v574
        %578 = vrot.lane.b32.xlu0 %v576, 96
        %v579 = vpop.permute.xlu0 %578
        %581 = vst.msk [vmem:[#allocation3] sm:$0xff] %vm234, %v579
        %v582 = vtanh.pop %v576
        %584 = vrot.lane.b32.xlu0 %v582, 32
        %v585 = vpop.permute.xlu0 %584
        %v587 = vmul.f32 %v559, %v585
        %589 = vrot.lane.b32.xlu0 %v587, 64
        %v590 = vpop.permute.xlu0 %589
        %592 = vst.msk [vmem:[#allocation2] sm:$0xff] %vm234, %v590
        %p593 = scmp.eq.s32.totalorder %s476, %s220
        // Predicated region
        $region49: #{sentence_classification_forward.1} parent=27 // pred_check
          %p594 = pneg %p593
        $region50: #{sentence_classification_forward.1} parent=27 // pred_check_branch
          %596 = sbr.rel (%p594) target = $region52
        $region51: #{sentence_classification_forward.1} parent=27 // pred_region
          %597 = vst.msk [vmem:[%s217] sm:$0xff] %vm234, %v590
        $region52: #{sentence_classification_forward.1} parent=27 // pred_fallthru
          _
        %s598 = sadd.s32 %s232, 3
        %v599 = vld [vmem:[#allocation2] sm:$0xff]
        %v601 = vsel %vm234, %v599, 0
        %603 = vmatprep.subr.mxu0 0.0
        %604 = vmatpush1.msra.mxu0 %v228
        %605 = vmatprep.subr.mxu0 0.0
        %606 = vmatpush1.msra.mxu0 %v229
        %607 = vmatprep.subr.mxu0 0.0
        %608 = vmatpush1.msra.mxu0 %v230
        %609 = vmatprep.subr.mxu0 0.0
        %610 = vmatpush1.msra.mxu0 %v231
        %611 = vmatprep.subr.mxu0 0.0
        %612 = vmatpush1.msra.mxu0 0.0
        %613 = vmatprep.subr.mxu0 0.0
        %614 = vmatpush1.msra.mxu0 0.0
        %615 = vmatprep.subr.mxu0 0.0
        %616 = vmatpush1.msra.mxu0 0.0
        %617 = vmatprep.subr.mxu0 0.0
        %618 = vmatpush1.msra.mxu0 0.0
        %619 = vmatprep.subr.mxu0 0.0
        %620 = vmatpush1.msra.mxu0 0.0
        %621 = vmatprep.subr.mxu0 0.0
        %622 = vmatpush1.msra.mxu0 0.0
        %623 = vmatprep.subr.mxu0 0.0
        %624 = vmatpush1.msra.mxu0 0.0
        %625 = vmatprep.subr.mxu0 0.0
        %626 = vmatpush1.msra.mxu0 0.0
        %627 = vmatprep.subr.mxu0 0.0
        %628 = vmatpush1.msra.mxu0 0.0
        %629 = vmatprep.subr.mxu0 0.0
        %630 = vmatpush1.msra.mxu0 0.0
        %631 = vmatprep.subr.mxu0 0.0
        %632 = vmatpush1.msra.mxu0 0.0
        %633 = vmatprep.subr.mxu0 0.0
        %634 = vmatpush1.msra.mxu0 0.0
        %635 = vmatprep.subr.mxu0 0.0
        %636 = vmatpush1.msra.mxu0 0.0
        %637 = vmatprep.subr.mxu0 0.0
        %638 = vmatpush1.msra.mxu0 0.0
        %639 = vmatprep.subr.mxu0 0.0
        %640 = vmatpush1.msra.mxu0 0.0
        %641 = vmatprep.subr.mxu0 0.0
        %642 = vmatpush1.msra.mxu0 0.0
        %643 = vmatprep.subr.mxu0 0.0
        %644 = vmatpush1.msra.mxu0 0.0
        %645 = vmatprep.subr.mxu0 0.0
        %646 = vmatpush1.msra.mxu0 0.0
        %647 = vmatprep.subr.mxu0 0.0
        %648 = vmatpush1.msra.mxu0 0.0
        %649 = vmatprep.subr.mxu0 0.0
        %650 = vmatpush1.msra.mxu0 0.0
        %651 = vmatprep.subr.mxu0 0.0
        %652 = vmatpush1.msra.mxu0 0.0
        %653 = vmatprep.subr.mxu0 0.0
        %654 = vmatpush1.msra.mxu0 0.0
        %655 = vmatprep.subr.mxu0 0.0
        %656 = vmatpush1.msra.mxu0 0.0
        %657 = vmatprep.subr.mxu0 0.0
        %658 = vmatpush1.msra.mxu0 0.0
        %659 = vmatprep.subr.mxu0 0.0
        %660 = vmatpush1.msra.mxu0 0.0
        %661 = vmatprep.subr.mxu0 0.0
        %662 = vmatpush1.msra.mxu0 0.0
        %663 = vmatprep.subr.mxu0 0.0
        %664 = vmatpush1.msra.mxu0 0.0
        %665 = vmatprep.subr.mxu0 0.0
        %666 = vmatpush1.msra.mxu0 0.0
        %667 = vmatprep.mubr.f32.mxu0 0.0
        %668 = vmatmul.mubr.f32.gmra.mrb[0].mxu0 %v601
        %v669 = vpop.f32.mrb[0].mxu0
        %v670 = vadd.f32 0.0, %v669
        %v671 = vpop.f32.mrb[0].mxu0
        %672 = vdwg.mxu0
        %s673 = scalar_lea.vmem %s183, 24 [#allocation4]
        %v674 = vld [vmem:[%s673] sm:$0xff]
        %v675 = vadd.f32 %v674, %v670
        %v676 = vxor.u32 %v675, 2147483648
        %v677 = vmul.f32 %v676, 1.442695
        %v678 = vpow.pop %v677
        %v679 = vadd.f32 %v678, 1.0
        %v680 = vrcp.pop %v679
        %v681 = vmul.f32 1.0, %v680
        %v682 = vtanh.pop %v675
        %v683 = vld [vmem:[#allocation3] sm:$0xff]
        %685 = vrot.lane.b32.xlu0 %v683, 32
        %v686 = vpop.permute.xlu0 %685
        %v688 = vmul.f32 %v681, %v686
        %690 = vrot.lane.b32.xlu0 %v682, 32
        %v691 = vpop.permute.xlu0 %690
        %v693 = vmul.f32 %v681, %v691
        %695 = vrot.lane.b32.xlu0 %v693, 32
        %v696 = vpop.permute.xlu0 %695
        %v698 = vadd.f32 %v688, %v696
        %700 = vrot.lane.b32.xlu0 %v698, 96
        %v701 = vpop.permute.xlu0 %700
        %703 = vst.msk [vmem:[#allocation3] sm:$0xff] %vm234, %v701
        %v704 = vtanh.pop %v698
        %706 = vrot.lane.b32.xlu0 %v704, 32
        %v707 = vpop.permute.xlu0 %706
        %v709 = vmul.f32 %v681, %v707
        %711 = vrot.lane.b32.xlu0 %v709, 64
        %v712 = vpop.permute.xlu0 %711
        %714 = vst.msk [vmem:[#allocation2] sm:$0xff] %vm234, %v712
        %p715 = scmp.eq.s32.totalorder %s598, %s220
        // Predicated region
        $region53: #{sentence_classification_forward.1} parent=27 // pred_check
          %p716 = pneg %p715
        $region54: #{sentence_classification_forward.1} parent=27 // pred_check_branch
          %718 = sbr.rel (%p716) target = $region56
        $region55: #{sentence_classification_forward.1} parent=27 // pred_region
          %719 = vst.msk [vmem:[%s217] sm:$0xff] %vm234, %v712
        $region56: #{sentence_classification_forward.1} parent=27 // pred_fallthru
          _
        %s720 = sadd.s32 %s232, 4
        %v721 = vld [vmem:[#allocation2] sm:$0xff]
        %v723 = vsel %vm234, %v721, 0
        %725 = vmatprep.subr.mxu0 0.0
        %726 = vmatpush1.msra.mxu0 %v228
        %727 = vmatprep.subr.mxu0 0.0
        %728 = vmatpush1.msra.mxu0 %v229
        %729 = vmatprep.subr.mxu0 0.0
        %730 = vmatpush1.msra.mxu0 %v230
        %731 = vmatprep.subr.mxu0 0.0
        %732 = vmatpush1.msra.mxu0 %v231
        %733 = vmatprep.subr.mxu0 0.0
        %734 = vmatpush1.msra.mxu0 0.0
        %735 = vmatprep.subr.mxu0 0.0
        %736 = vmatpush1.msra.mxu0 0.0
        %737 = vmatprep.subr.mxu0 0.0
        %738 = vmatpush1.msra.mxu0 0.0
        %739 = vmatprep.subr.mxu0 0.0
        %740 = vmatpush1.msra.mxu0 0.0
        %741 = vmatprep.subr.mxu0 0.0
        %742 = vmatpush1.msra.mxu0 0.0
        %743 = vmatprep.subr.mxu0 0.0
        %744 = vmatpush1.msra.mxu0 0.0
        %745 = vmatprep.subr.mxu0 0.0
        %746 = vmatpush1.msra.mxu0 0.0
        %747 = vmatprep.subr.mxu0 0.0
        %748 = vmatpush1.msra.mxu0 0.0
        %749 = vmatprep.subr.mxu0 0.0
        %750 = vmatpush1.msra.mxu0 0.0
        %751 = vmatprep.subr.mxu0 0.0
        %752 = vmatpush1.msra.mxu0 0.0
        %753 = vmatprep.subr.mxu0 0.0
        %754 = vmatpush1.msra.mxu0 0.0
        %755 = vmatprep.subr.mxu0 0.0
        %756 = vmatpush1.msra.mxu0 0.0
        %757 = vmatprep.subr.mxu0 0.0
        %758 = vmatpush1.msra.mxu0 0.0
        %759 = vmatprep.subr.mxu0 0.0
        %760 = vmatpush1.msra.mxu0 0.0
        %761 = vmatprep.subr.mxu0 0.0
        %762 = vmatpush1.msra.mxu0 0.0
        %763 = vmatprep.subr.mxu0 0.0
        %764 = vmatpush1.msra.mxu0 0.0
        %765 = vmatprep.subr.mxu0 0.0
        %766 = vmatpush1.msra.mxu0 0.0
        %767 = vmatprep.subr.mxu0 0.0
        %768 = vmatpush1.msra.mxu0 0.0
        %769 = vmatprep.subr.mxu0 0.0
        %770 = vmatpush1.msra.mxu0 0.0
        %771 = vmatprep.subr.mxu0 0.0
        %772 = vmatpush1.msra.mxu0 0.0
        %773 = vmatprep.subr.mxu0 0.0
        %774 = vmatpush1.msra.mxu0 0.0
        %775 = vmatprep.subr.mxu0 0.0
        %776 = vmatpush1.msra.mxu0 0.0
        %777 = vmatprep.subr.mxu0 0.0
        %778 = vmatpush1.msra.mxu0 0.0
        %779 = vmatprep.subr.mxu0 0.0
        %780 = vmatpush1.msra.mxu0 0.0
        %781 = vmatprep.subr.mxu0 0.0
        %782 = vmatpush1.msra.mxu0 0.0
        %783 = vmatprep.subr.mxu0 0.0
        %784 = vmatpush1.msra.mxu0 0.0
        %785 = vmatprep.subr.mxu0 0.0
        %786 = vmatpush1.msra.mxu0 0.0
        %787 = vmatprep.subr.mxu0 0.0
        %788 = vmatpush1.msra.mxu0 0.0
        %789 = vmatprep.mubr.f32.mxu0 0.0
        %790 = vmatmul.mubr.f32.gmra.mrb[0].mxu0 %v723
        %v791 = vpop.f32.mrb[0].mxu0
        %v792 = vadd.f32 0.0, %v791
        %v793 = vpop.f32.mrb[0].mxu0
        %794 = vdwg.mxu0
        %s795 = scalar_lea.vmem %s183, 32 [#allocation4]
        %v796 = vld [vmem:[%s795] sm:$0xff]
        %v797 = vadd.f32 %v796, %v792
        %v798 = vxor.u32 %v797, 2147483648
        %v799 = vmul.f32 %v798, 1.442695
        %v800 = vpow.pop %v799
        %v801 = vadd.f32 %v800, 1.0
        %v802 = vrcp.pop %v801
        %v803 = vmul.f32 1.0, %v802
        %v804 = vtanh.pop %v797
        %v805 = vld [vmem:[#allocation3] sm:$0xff]
        %807 = vrot.lane.b32.xlu0 %v805, 32
        %v808 = vpop.permute.xlu0 %807
        %v810 = vmul.f32 %v803, %v808
        %812 = vrot.lane.b32.xlu0 %v804, 32
        %v813 = vpop.permute.xlu0 %812
        %v815 = vmul.f32 %v803, %v813
        %817 = vrot.lane.b32.xlu0 %v815, 32
        %v818 = vpop.permute.xlu0 %817
        %v820 = vadd.f32 %v810, %v818
        %822 = vrot.lane.b32.xlu0 %v820, 96
        %v823 = vpop.permute.xlu0 %822
        %825 = vst.msk [vmem:[#allocation3] sm:$0xff] %vm234, %v823
        %v826 = vtanh.pop %v820
        %828 = vrot.lane.b32.xlu0 %v826, 32
        %v829 = vpop.permute.xlu0 %828
        %v831 = vmul.f32 %v803, %v829
        %833 = vrot.lane.b32.xlu0 %v831, 64
        %v834 = vpop.permute.xlu0 %833
        %836 = vst.msk [vmem:[#allocation2] sm:$0xff] %vm234, %v834
        %p837 = scmp.eq.s32.totalorder %s720, %s220
        // Predicated region
        $region57: #{sentence_classification_forward.1} parent=27 // pred_check
          %p838 = pneg %p837
        $region58: #{sentence_classification_forward.1} parent=27 // pred_check_branch
          %840 = sbr.rel (%p838) target = $region60
        $region59: #{sentence_classification_forward.1} parent=27 // pred_region
          %841 = vst.msk [vmem:[%s217] sm:$0xff] %vm234, %v834
        $region60: #{sentence_classification_forward.1} parent=27 // pred_fallthru
          _
        %s842 = sadd.s32 %s232, 5
        %v843 = vld [vmem:[#allocation2] sm:$0xff]
        %v845 = vsel %vm234, %v843, 0
        %847 = vmatprep.subr.mxu0 0.0
        %848 = vmatpush1.msra.mxu0 %v228
        %849 = vmatprep.subr.mxu0 0.0
        %850 = vmatpush1.msra.mxu0 %v229
        %851 = vmatprep.subr.mxu0 0.0
        %852 = vmatpush1.msra.mxu0 %v230
        %853 = vmatprep.subr.mxu0 0.0
        %854 = vmatpush1.msra.mxu0 %v231
        %855 = vmatprep.subr.mxu0 0.0
        %856 = vmatpush1.msra.mxu0 0.0
        %857 = vmatprep.subr.mxu0 0.0
        %858 = vmatpush1.msra.mxu0 0.0
        %859 = vmatprep.subr.mxu0 0.0
        %860 = vmatpush1.msra.mxu0 0.0
        %861 = vmatprep.subr.mxu0 0.0
        %862 = vmatpush1.msra.mxu0 0.0
        %863 = vmatprep.subr.mxu0 0.0
        %864 = vmatpush1.msra.mxu0 0.0
        %865 = vmatprep.subr.mxu0 0.0
        %866 = vmatpush1.msra.mxu0 0.0
        %867 = vmatprep.subr.mxu0 0.0
        %868 = vmatpush1.msra.mxu0 0.0
        %869 = vmatprep.subr.mxu0 0.0
        %870 = vmatpush1.msra.mxu0 0.0
        %871 = vmatprep.subr.mxu0 0.0
        %872 = vmatpush1.msra.mxu0 0.0
        %873 = vmatprep.subr.mxu0 0.0
        %874 = vmatpush1.msra.mxu0 0.0
        %875 = vmatprep.subr.mxu0 0.0
        %876 = vmatpush1.msra.mxu0 0.0
        %877 = vmatprep.subr.mxu0 0.0
        %878 = vmatpush1.msra.mxu0 0.0
        %879 = vmatprep.subr.mxu0 0.0
        %880 = vmatpush1.msra.mxu0 0.0
        %881 = vmatprep.subr.mxu0 0.0
        %882 = vmatpush1.msra.mxu0 0.0
        %883 = vmatprep.subr.mxu0 0.0
        %884 = vmatpush1.msra.mxu0 0.0
        %885 = vmatprep.subr.mxu0 0.0
        %886 = vmatpush1.msra.mxu0 0.0
        %887 = vmatprep.subr.mxu0 0.0
        %888 = vmatpush1.msra.mxu0 0.0
        %889 = vmatprep.subr.mxu0 0.0
        %890 = vmatpush1.msra.mxu0 0.0
        %891 = vmatprep.subr.mxu0 0.0
        %892 = vmatpush1.msra.mxu0 0.0
        %893 = vmatprep.subr.mxu0 0.0
        %894 = vmatpush1.msra.mxu0 0.0
        %895 = vmatprep.subr.mxu0 0.0
        %896 = vmatpush1.msra.mxu0 0.0
        %897 = vmatprep.subr.mxu0 0.0
        %898 = vmatpush1.msra.mxu0 0.0
        %899 = vmatprep.subr.mxu0 0.0
        %900 = vmatpush1.msra.mxu0 0.0
        %901 = vmatprep.subr.mxu0 0.0
        %902 = vmatpush1.msra.mxu0 0.0
        %903 = vmatprep.subr.mxu0 0.0
        %904 = vmatpush1.msra.mxu0 0.0
        %905 = vmatprep.subr.mxu0 0.0
        %906 = vmatpush1.msra.mxu0 0.0
        %907 = vmatprep.subr.mxu0 0.0
        %908 = vmatpush1.msra.mxu0 0.0
        %909 = vmatprep.subr.mxu0 0.0
        %910 = vmatpush1.msra.mxu0 0.0
        %911 = vmatprep.mubr.f32.mxu0 0.0
        %912 = vmatmul.mubr.f32.gmra.mrb[0].mxu0 %v845
        %v913 = vpop.f32.mrb[0].mxu0
        %v914 = vadd.f32 0.0, %v913
        %v915 = vpop.f32.mrb[0].mxu0
        %916 = vdwg.mxu0
        %s917 = scalar_lea.vmem %s183, 40 [#allocation4]
        %v918 = vld [vmem:[%s917] sm:$0xff]
        %v919 = vadd.f32 %v918, %v914
        %v920 = vxor.u32 %v919, 2147483648
        %v921 = vmul.f32 %v920, 1.442695
        %v922 = vpow.pop %v921
        %v923 = vadd.f32 %v922, 1.0
        %v924 = vrcp.pop %v923
        %v925 = vmul.f32 1.0, %v924
        %v926 = vtanh.pop %v919
        %v927 = vld [vmem:[#allocation3] sm:$0xff]
        %929 = vrot.lane.b32.xlu0 %v927, 32
        %v930 = vpop.permute.xlu0 %929
        %v932 = vmul.f32 %v925, %v930
        %934 = vrot.lane.b32.xlu0 %v926, 32
        %v935 = vpop.permute.xlu0 %934
        %v937 = vmul.f32 %v925, %v935
        %939 = vrot.lane.b32.xlu0 %v937, 32
        %v940 = vpop.permute.xlu0 %939
        %v942 = vadd.f32 %v932, %v940
        %944 = vrot.lane.b32.xlu0 %v942, 96
        %v945 = vpop.permute.xlu0 %944
        %947 = vst.msk [vmem:[#allocation3] sm:$0xff] %vm234, %v945
        %v948 = vtanh.pop %v942
        %950 = vrot.lane.b32.xlu0 %v948, 32
        %v951 = vpop.permute.xlu0 %950
        %v953 = vmul.f32 %v925, %v951
        %955 = vrot.lane.b32.xlu0 %v953, 64
        %v956 = vpop.permute.xlu0 %955
        %958 = vst.msk [vmem:[#allocation2] sm:$0xff] %vm234, %v956
        %p959 = scmp.eq.s32.totalorder %s842, %s220
        // Predicated region
        $region61: #{sentence_classification_forward.1} parent=27 // pred_check
          %p960 = pneg %p959
        $region62: #{sentence_classification_forward.1} parent=27 // pred_check_branch
          %962 = sbr.rel (%p960) target = $region64
        $region63: #{sentence_classification_forward.1} parent=27 // pred_region
          %963 = vst.msk [vmem:[%s217] sm:$0xff] %vm234, %v956
        $region64: #{sentence_classification_forward.1} parent=27 // pred_fallthru
          _
        %s964 = sadd.s32 %s232, 6
        %v965 = vld [vmem:[#allocation2] sm:$0xff]
        %v967 = vsel %vm234, %v965, 0
        %969 = vmatprep.subr.mxu0 0.0
        %970 = vmatpush1.msra.mxu0 %v228
        %971 = vmatprep.subr.mxu0 0.0
        %972 = vmatpush1.msra.mxu0 %v229
        %973 = vmatprep.subr.mxu0 0.0
        %974 = vmatpush1.msra.mxu0 %v230
        %975 = vmatprep.subr.mxu0 0.0
        %976 = vmatpush1.msra.mxu0 %v231
        %977 = vmatprep.subr.mxu0 0.0
        %978 = vmatpush1.msra.mxu0 0.0
        %979 = vmatprep.subr.mxu0 0.0
        %980 = vmatpush1.msra.mxu0 0.0
        %981 = vmatprep.subr.mxu0 0.0
        %982 = vmatpush1.msra.mxu0 0.0
        %983 = vmatprep.subr.mxu0 0.0
        %984 = vmatpush1.msra.mxu0 0.0
        %985 = vmatprep.subr.mxu0 0.0
        %986 = vmatpush1.msra.mxu0 0.0
        %987 = vmatprep.subr.mxu0 0.0
        %988 = vmatpush1.msra.mxu0 0.0
        %989 = vmatprep.subr.mxu0 0.0
        %990 = vmatpush1.msra.mxu0 0.0
        %991 = vmatprep.subr.mxu0 0.0
        %992 = vmatpush1.msra.mxu0 0.0
        %993 = vmatprep.subr.mxu0 0.0
        %994 = vmatpush1.msra.mxu0 0.0
        %995 = vmatprep.subr.mxu0 0.0
        %996 = vmatpush1.msra.mxu0 0.0
        %997 = vmatprep.subr.mxu0 0.0
        %998 = vmatpush1.msra.mxu0 0.0
        %999 = vmatprep.subr.mxu0 0.0
        %1000 = vmatpush1.msra.mxu0 0.0
        %1001 = vmatprep.subr.mxu0 0.0
        %1002 = vmatpush1.msra.mxu0 0.0
        %1003 = vmatprep.subr.mxu0 0.0
        %1004 = vmatpush1.msra.mxu0 0.0
        %1005 = vmatprep.subr.mxu0 0.0
        %1006 = vmatpush1.msra.mxu0 0.0
        %1007 = vmatprep.subr.mxu0 0.0
        %1008 = vmatpush1.msra.mxu0 0.0
        %1009 = vmatprep.subr.mxu0 0.0
        %1010 = vmatpush1.msra.mxu0 0.0
        %1011 = vmatprep.subr.mxu0 0.0
        %1012 = vmatpush1.msra.mxu0 0.0
        %1013 = vmatprep.subr.mxu0 0.0
        %1014 = vmatpush1.msra.mxu0 0.0
        %1015 = vmatprep.subr.mxu0 0.0
        %1016 = vmatpush1.msra.mxu0 0.0
        %1017 = vmatprep.subr.mxu0 0.0
        %1018 = vmatpush1.msra.mxu0 0.0
        %1019 = vmatprep.subr.mxu0 0.0
        %1020 = vmatpush1.msra.mxu0 0.0
        %1021 = vmatprep.subr.mxu0 0.0
        %1022 = vmatpush1.msra.mxu0 0.0
        %1023 = vmatprep.subr.mxu0 0.0
        %1024 = vmatpush1.msra.mxu0 0.0
        %1025 = vmatprep.subr.mxu0 0.0
        %1026 = vmatpush1.msra.mxu0 0.0
        %1027 = vmatprep.subr.mxu0 0.0
        %1028 = vmatpush1.msra.mxu0 0.0
        %1029 = vmatprep.subr.mxu0 0.0
        %1030 = vmatpush1.msra.mxu0 0.0
        %1031 = vmatprep.subr.mxu0 0.0
        %1032 = vmatpush1.msra.mxu0 0.0
        %1033 = vmatprep.mubr.f32.mxu0 0.0
        %1034 = vmatmul.mubr.f32.gmra.mrb[0].mxu0 %v967
        %v1035 = vpop.f32.mrb[0].mxu0
        %v1036 = vadd.f32 0.0, %v1035
        %v1037 = vpop.f32.mrb[0].mxu0
        %1038 = vdwg.mxu0
        %s1039 = scalar_lea.vmem %s183, 48 [#allocation4]
        %v1040 = vld [vmem:[%s1039] sm:$0xff]
        %v1041 = vadd.f32 %v1040, %v1036
        %v1042 = vxor.u32 %v1041, 2147483648
        %v1043 = vmul.f32 %v1042, 1.442695
        %v1044 = vpow.pop %v1043
        %v1045 = vadd.f32 %v1044, 1.0
        %v1046 = vrcp.pop %v1045
        %v1047 = vmul.f32 1.0, %v1046
        %v1048 = vtanh.pop %v1041
        %v1049 = vld [vmem:[#allocation3] sm:$0xff]
        %1051 = vrot.lane.b32.xlu0 %v1049, 32
        %v1052 = vpop.permute.xlu0 %1051
        %v1054 = vmul.f32 %v1047, %v1052
        %1056 = vrot.lane.b32.xlu0 %v1048, 32
        %v1057 = vpop.permute.xlu0 %1056
        %v1059 = vmul.f32 %v1047, %v1057
        %1061 = vrot.lane.b32.xlu0 %v1059, 32
        %v1062 = vpop.permute.xlu0 %1061
        %v1064 = vadd.f32 %v1054, %v1062
        %1066 = vrot.lane.b32.xlu0 %v1064, 96
        %v1067 = vpop.permute.xlu0 %1066
        %1069 = vst.msk [vmem:[#allocation3] sm:$0xff] %vm234, %v1067
        %v1070 = vtanh.pop %v1064
        %1072 = vrot.lane.b32.xlu0 %v1070, 32
        %v1073 = vpop.permute.xlu0 %1072
        %v1075 = vmul.f32 %v1047, %v1073
        %1077 = vrot.lane.b32.xlu0 %v1075, 64
        %v1078 = vpop.permute.xlu0 %1077
        %1080 = vst.msk [vmem:[#allocation2] sm:$0xff] %vm234, %v1078
        %p1081 = scmp.eq.s32.totalorder %s964, %s220
        // Predicated region
        $region65: #{sentence_classification_forward.1} parent=27 // pred_check
          %p1082 = pneg %p1081
        $region66: #{sentence_classification_forward.1} parent=27 // pred_check_branch
          %1084 = sbr.rel (%p1082) target = $region68
        $region67: #{sentence_classification_forward.1} parent=27 // pred_region
          %1085 = vst.msk [vmem:[%s217] sm:$0xff] %vm234, %v1078
        $region68: #{sentence_classification_forward.1} parent=27 // pred_fallthru
          _
        %s1086 = sadd.s32 %s232, 7
        %v1087 = vld [vmem:[#allocation2] sm:$0xff]
        %v1089 = vsel %vm234, %v1087, 0
        %1091 = vmatprep.subr.mxu0 0.0
        %1092 = vmatpush1.msra.mxu0 %v228
        %1093 = vmatprep.subr.mxu0 0.0
        %1094 = vmatpush1.msra.mxu0 %v229
        %1095 = vmatprep.subr.mxu0 0.0
        %1096 = vmatpush1.msra.mxu0 %v230
        %1097 = vmatprep.subr.mxu0 0.0
        %1098 = vmatpush1.msra.mxu0 %v231
        %1099 = vmatprep.subr.mxu0 0.0
        %1100 = vmatpush1.msra.mxu0 0.0
        %1101 = vmatprep.subr.mxu0 0.0
        %1102 = vmatpush1.msra.mxu0 0.0
        %1103 = vmatprep.subr.mxu0 0.0
        %1104 = vmatpush1.msra.mxu0 0.0
        %1105 = vmatprep.subr.mxu0 0.0
        %1106 = vmatpush1.msra.mxu0 0.0
        %1107 = vmatprep.subr.mxu0 0.0
        %1108 = vmatpush1.msra.mxu0 0.0
        %1109 = vmatprep.subr.mxu0 0.0
        %1110 = vmatpush1.msra.mxu0 0.0
        %1111 = vmatprep.subr.mxu0 0.0
        %1112 = vmatpush1.msra.mxu0 0.0
        %1113 = vmatprep.subr.mxu0 0.0
        %1114 = vmatpush1.msra.mxu0 0.0
        %1115 = vmatprep.subr.mxu0 0.0
        %1116 = vmatpush1.msra.mxu0 0.0
        %1117 = vmatprep.subr.mxu0 0.0
        %1118 = vmatpush1.msra.mxu0 0.0
        %1119 = vmatprep.subr.mxu0 0.0
        %1120 = vmatpush1.msra.mxu0 0.0
        %1121 = vmatprep.subr.mxu0 0.0
        %1122 = vmatpush1.msra.mxu0 0.0
        %1123 = vmatprep.subr.mxu0 0.0
        %1124 = vmatpush1.msra.mxu0 0.0
        %1125 = vmatprep.subr.mxu0 0.0
        %1126 = vmatpush1.msra.mxu0 0.0
        %1127 = vmatprep.subr.mxu0 0.0
        %1128 = vmatpush1.msra.mxu0 0.0
        %1129 = vmatprep.subr.mxu0 0.0
        %1130 = vmatpush1.msra.mxu0 0.0
        %1131 = vmatprep.subr.mxu0 0.0
        %1132 = vmatpush1.msra.mxu0 0.0
        %1133 = vmatprep.subr.mxu0 0.0
        %1134 = vmatpush1.msra.mxu0 0.0
        %1135 = vmatprep.subr.mxu0 0.0
        %1136 = vmatpush1.msra.mxu0 0.0
        %1137 = vmatprep.subr.mxu0 0.0
        %1138 = vmatpush1.msra.mxu0 0.0
        %1139 = vmatprep.subr.mxu0 0.0
        %1140 = vmatpush1.msra.mxu0 0.0
        %1141 = vmatprep.subr.mxu0 0.0
        %1142 = vmatpush1.msra.mxu0 0.0
        %1143 = vmatprep.subr.mxu0 0.0
        %1144 = vmatpush1.msra.mxu0 0.0
        %1145 = vmatprep.subr.mxu0 0.0
        %1146 = vmatpush1.msra.mxu0 0.0
        %1147 = vmatprep.subr.mxu0 0.0
        %1148 = vmatpush1.msra.mxu0 0.0
        %1149 = vmatprep.subr.mxu0 0.0
        %1150 = vmatpush1.msra.mxu0 0.0
        %1151 = vmatprep.subr.mxu0 0.0
        %1152 = vmatpush1.msra.mxu0 0.0
        %1153 = vmatprep.subr.mxu0 0.0
        %1154 = vmatpush1.msra.mxu0 0.0
        %1155 = vmatprep.mubr.f32.mxu0 0.0
        %1156 = vmatmul.mubr.f32.gmra.mrb[0].mxu0 %v1089
        %v1157 = vpop.f32.mrb[0].mxu0
        %v1158 = vadd.f32 0.0, %v1157
        %v1159 = vpop.f32.mrb[0].mxu0
        %1160 = vdwg.mxu0
        %s1161 = scalar_lea.vmem %s183, 56 [#allocation4]
        %v1162 = vld [vmem:[%s1161] sm:$0xff]
        %v1163 = vadd.f32 %v1162, %v1158
        %v1164 = vxor.u32 %v1163, 2147483648
        %v1165 = vmul.f32 %v1164, 1.442695
        %v1166 = vpow.pop %v1165
        %v1167 = vadd.f32 %v1166, 1.0
        %v1168 = vrcp.pop %v1167
        %v1169 = vmul.f32 1.0, %v1168
        %v1170 = vtanh.pop %v1163
        %v1171 = vld [vmem:[#allocation3] sm:$0xff]
        %1173 = vrot.lane.b32.xlu0 %v1171, 32
        %v1174 = vpop.permute.xlu0 %1173
        %v1176 = vmul.f32 %v1169, %v1174
        %1178 = vrot.lane.b32.xlu0 %v1170, 32
        %v1179 = vpop.permute.xlu0 %1178
        %v1181 = vmul.f32 %v1169, %v1179
        %1183 = vrot.lane.b32.xlu0 %v1181, 32
        %v1184 = vpop.permute.xlu0 %1183
        %v1186 = vadd.f32 %v1176, %v1184
        %1188 = vrot.lane.b32.xlu0 %v1186, 96
        %v1189 = vpop.permute.xlu0 %1188
        %1191 = vst.msk [vmem:[#allocation3] sm:$0xff] %vm234, %v1189
        %v1192 = vtanh.pop %v1186
        %1194 = vrot.lane.b32.xlu0 %v1192, 32
        %v1195 = vpop.permute.xlu0 %1194
        %v1197 = vmul.f32 %v1169, %v1195
        %1199 = vrot.lane.b32.xlu0 %v1197, 64
        %v1200 = vpop.permute.xlu0 %1199
        %1202 = vst.msk [vmem:[#allocation2] sm:$0xff] %vm234, %v1200
        %p1203 = scmp.eq.s32.totalorder %s1086, %s220
        // Predicated region
        $region69: #{sentence_classification_forward.1} parent=27 // pred_check
          %p1204 = pneg %p1203
        $region70: #{sentence_classification_forward.1} parent=27 // pred_check_branch
          %1206 = sbr.rel (%p1204) target = $region72
        $region71: #{sentence_classification_forward.1} parent=27 // pred_region
          %1207 = vst.msk [vmem:[%s217] sm:$0xff] %vm234, %v1200
        $region72: #{sentence_classification_forward.1} parent=27 // pred_fallthru
          _
        %s1208 = sand.u32 %s96, 1
        %s1209 = scalar_lea.sflag [#allocation6], %s1208
        %s1210 = sand.u32 %s96, 1
        %s1211 = smul.addr %s1210, 8
        %s1212 = scalar_lea.vmem [#allocation9], %s1211
        // Predicated region
        $region73: #{sentence_classification_forward.1} parent=27 // pred_check
          %p1213 = pneg %p106
        $region74: #{sentence_classification_forward.1} parent=27 // pred_check_branch
          %1215 = sbr.rel (%p1213) target = $region76
        $region75: #{sentence_classification_forward.1} parent=27 // pred_region
          %s1217 = ssub.s32 128, 128
          %1218 = vsyncadd %s1209, %s1217
          %s1219 = smul.addr %s26, 128
          %s1220 = scalar_lea.hbm %s2, %s1219
          %s1222 = sshll.u32 %s1212, 4
          %s1223 = int_to_ptr.vmem [resolvable:$true] %s1222
          %1225 = dma.vmem_to_hbm [thread:$0]  %s1223, 128, %s1220, %s1209
        $region76: #{sentence_classification_forward.1} parent=27 // pred_fallthru
          _
      $region28: #{sentence_classification_forward.1} parent=5 // pred_fallthru
        _
      %p1226 = scmp.le.s32.totalorder 2, %s17
      // Predicated region
      $region77: #{sentence_classification_forward.1} parent=5 // pred_check
        %p1227 = pneg %p1226
      $region78: #{sentence_classification_forward.1} parent=5 // pred_check_branch
        %1229 = sbr.rel (%p1227) target = $region80
      $region79: #{sentence_classification_forward.1} parent=5 // pred_region
        %s1230 = ssub.s32 %s17, 2
        // Predicated region
        $region81: #{sentence_classification_forward.1} parent=79 // pred_check
          %p1231 = pneg %p112
        $region82: #{sentence_classification_forward.1} parent=79 // pred_check_branch
          %1233 = sbr.rel (%p1231) target = $region84
        $region83: #{sentence_classification_forward.1} parent=79 // pred_region
          %s1234 = sand.u32 %s97, 1
          %s1235 = scalar_lea.sflag [#allocation6], %s1234
          %s1236 = sand.u32 %s97, 1
          %s1237 = smul.addr %s1236, 8
          %s1238 = scalar_lea.vmem [#allocation9], %s1237
          %1239 = dma.done %s1235, 128
        $region84: #{sentence_classification_forward.1} parent=79 // pred_fallthru
          _
      $region80: #{sentence_classification_forward.1} parent=5 // pred_fallthru
        _
    $region6: #{sentence_classification_forward.1} parent=1 // loop_footer
      %s21 = sadd.s32 1, %s17
    $region7: #{sentence_classification_forward.1} parent=1 // loop_footer_branch
      %16 = sbr.rel target = $region3
    $region8: #{sentence_classification_forward.1} parent=1 // loop_exit
      _
    %1240 = vsyncpa [#allocation5], 1
    %s1241 = scalar_lea.sflag [#allocation5], 1
    %1242 = vsyncpa %s1241, 1
    %1243 = vsyncpa [#allocation8], 1
    %s1244 = scalar_lea.sflag [#allocation8], 1
    %1245 = vsyncpa %s1244, 1
    %1246 = vsyncpa [#allocation6], 1
    %s1247 = scalar_lea.sflag [#allocation6], 1
    %1248 = vsyncpa %s1247, 1

</llo_original>
